<compile_context>
chip_gen: v5e
topology: v5e:2x2
jax: 0.10.0
libtpu: 0.0.40
codegen_flags: <defaults>
</compile_context>

<pallas_src>
import math
from functools import partial

import numpy as np
import jax
import jax.numpy as jnp
from jax.experimental import pallas as pl
from jax.experimental.pallas import tpu as pltpu

LN_EPS = 1e-5  # torch.nn.LayerNorm default


# ---------------------------------------------------------------------------
# sin-cos positional embedding (numpy, identical to the PyTorch reference)
# ---------------------------------------------------------------------------
def get_1d_sincos_pos_embed_from_grid(embed_dim, pos):
    assert embed_dim % 2 == 0
    omega = np.arange(embed_dim // 2, dtype=np.float32)
    omega /= embed_dim / 2.0
    omega = 1.0 / 10000 ** omega
    pos = pos.reshape(-1)
    out = np.einsum('m,d->md', pos, omega)
    emb_sin = np.sin(out)
    emb_cos = np.cos(out)
    return np.concatenate([emb_sin, emb_cos], axis=1)


def get_3d_sincos_pos_embed(embed_dim, grid_size, cls_token=False):
    assert embed_dim % 16 == 0
    t_size, h_size, w_size = grid_size
    w_embed_dim = embed_dim // 16 * 6
    h_embed_dim = embed_dim // 16 * 6
    t_embed_dim = embed_dim // 16 * 4
    w_pos_embed = get_1d_sincos_pos_embed_from_grid(w_embed_dim, np.arange(w_size))
    h_pos_embed = get_1d_sincos_pos_embed_from_grid(h_embed_dim, np.arange(h_size))
    t_pos_embed = get_1d_sincos_pos_embed_from_grid(t_embed_dim, np.arange(t_size))
    w_pos_embed = np.tile(w_pos_embed, (t_size * h_size, 1))
    h_pos_embed = np.tile(np.repeat(h_pos_embed, w_size, axis=0), (t_size, 1))
    t_pos_embed = np.repeat(t_pos_embed, h_size * w_size, axis=0)
    pos_embed = np.concatenate((w_pos_embed, h_pos_embed, t_pos_embed), axis=1)
    if cls_token:
        pos_embed = np.concatenate([np.zeros([1, embed_dim]), pos_embed], axis=0)
    return pos_embed


# ---------------------------------------------------------------------------
# In-kernel math helpers
# ---------------------------------------------------------------------------
def _layernorm(x, w, b):
    mu = jnp.mean(x, axis=-1, keepdims=True)
    xc = x - mu
    var = jnp.mean(xc * xc, axis=-1, keepdims=True)
    inv = jax.lax.rsqrt(var + LN_EPS)
    return xc * inv * w + b


def _gelu_tanh(x):
    # tanh-approximation GELU: tanh lowers to the EUP slot, keeping the VALU free.
    c = math.sqrt(2.0 / math.pi)
    return 0.5 * x * (1.0 + jnp.tanh(c * (x + 0.044715 * x * x * x)))


def _mm(a, b):
    # bf16 MXU matmul with f32 accumulation; `b` (weights) is already bf16.
    return jax.lax.dot_general(a.astype(jnp.bfloat16), b,
                               (((1,), (0,)), ((), ())),
                               preferred_element_type=jnp.float32)


# ---------------------------------------------------------------------------
# Kernel 1: patch embedding (Conv3d with stride==kernel  ==  patch matmul)
#           fused with "+ pos_embed[:, 1:, :]"
# ---------------------------------------------------------------------------
def patch_embed_kernel(patch_ref, w_ref, b_ref, pos_ref, out_ref):
    y = _mm(patch_ref[0], w_ref[...])                # (L, E), bf16 MXU / f32 acc
    out_ref[0] = y + b_ref[...] + pos_ref[...]       # bias + pos embed (f32)


def patch_embed(patches, w, b, pos):
    B, L, K = patches.shape
    E = w.shape[1]
    return pl.pallas_call(
        patch_embed_kernel,
        out_shape=jax.ShapeDtypeStruct((B, L, E), jnp.float32),
        grid=(B,),
        in_specs=[
            pl.BlockSpec((1, L, K), lambda b_: (b_, 0, 0)),
            pl.BlockSpec((K, E), lambda b_: (0, 0)),
            pl.BlockSpec((1, E), lambda b_: (0, 0)),
            pl.BlockSpec((L, E), lambda b_: (0, 0)),
        ],
        out_specs=pl.BlockSpec((1, L, E), lambda b_: (b_, 0, 0)),
        compiler_params=pltpu.CompilerParams(dimension_semantics=("parallel",)),
    )(patches, w, b, pos)


# ---------------------------------------------------------------------------
# Kernel 2: ALL ViT blocks in one pallas_call, grid = (batch, depth).
#   - residual stream resident in a VMEM scratch across the layer axis
#   - per-layer weights are grid-indexed -> Pallas double-buffers / prefetches
#     layer l+1 weights while layer l computes.
# ---------------------------------------------------------------------------
def blocks_kernel(x_ref, ln1w_ref, ln1b_ref, qkvw_ref, qkvb_ref,
                  projw_ref, projb_ref, ln2w_ref, ln2b_ref,
                  fc1w_ref, fc1b_ref, fc2w_ref, fc2b_ref,
                  out_ref, acc_ref, ctx_ref, *, num_heads):
    l = pl.program_id(1)

    @pl.when(l == 0)
    def _():
        acc_ref[...] = x_ref[0].astype(jnp.float32)

    x = acc_ref[...]                                  # (N, E) f32 residual stream
    N, E = x.shape
    hd = E // num_heads
    scale = 1.0 / math.sqrt(hd)

    # --- pre-LN multi-head self-attention ---
    h = _layernorm(x, ln1w_ref[0], ln1b_ref[0])
    qkv = _mm(h, qkvw_ref[0]) + qkvb_ref[0]           # (N, 3E) f32
    q = qkv[:, :E] * scale                            # fold 1/sqrt(hd) into q once
    k = qkv[:, E:2 * E]
    v = qkv[:, 2 * E:]
    # head-major (num_heads, N, hd) operands -> one batched dot_general each
    qh = jnp.stack([q[:, i * hd:(i + 1) * hd] for i in range(num_heads)]).astype(jnp.bfloat16)
    kh = jnp.stack([k[:, i * hd:(i + 1) * hd] for i in range(num_heads)]).astype(jnp.bfloat16)
    vh = jnp.stack([v[:, i * hd:(i + 1) * hd] for i in range(num_heads)]).astype(jnp.bfloat16)
    att = jax.lax.dot_general(qh, kh, (((2,), (2,)), ((0,), (0,))),
                              preferred_element_type=jnp.float32)       # (nh, N, N)
    att = jnp.exp(att - jnp.max(att, axis=-1, keepdims=True))
    att = att * pl.reciprocal(jnp.sum(att, axis=-1, keepdims=True), approx=True)
    ctx = jax.lax.dot_general(att.astype(jnp.bfloat16), vh,
                              (((2,), (1,)), ((0,), (0,))),
                              preferred_element_type=jnp.float32)       # (nh, N, hd)
    # merge heads by writing each head's lane slice into a bf16 VMEM scratch
    # (no jnp.concatenate relayout), then one fused output projection.
    for i in range(num_heads):
        ctx_ref[:, i * hd:(i + 1) * hd] = ctx[i].astype(jnp.bfloat16)
    attn = jax.lax.dot_general(ctx_ref[...], projw_ref[0],
                               (((1,), (0,)), ((), ())),
                               preferred_element_type=jnp.float32) + projb_ref[0]
    x = x + attn

    # --- pre-LN MLP ---
    h2 = _layernorm(x, ln2w_ref[0], ln2b_ref[0])
    m = _mm(h2, fc1w_ref[0]) + fc1b_ref[0]
    m = _gelu_tanh(m)
    m = _mm(m, fc2w_ref[0]) + fc2b_ref[0]
    x = x + m

    acc_ref[...] = x

    @pl.when(l == pl.num_programs(1) - 1)
    def _():
        out_ref[0] = x.astype(out_ref.dtype)


_BLOCK_WEIGHT_KEYS = ["ln1_w", "ln1_b", "qkv_w", "qkv_b", "proj_w", "proj_b",
                      "ln2_w", "ln2_b", "fc1_w", "fc1_b", "fc2_w", "fc2_b"]


def transformer_blocks(x, bp, num_heads):
    B, N, E = x.shape
    depth = bp["qkv_w"].shape[0]

    def wspec(arr):
        ndim = arr.ndim
        # per-layer block of a (depth, ...) stacked weight; weights change along
        # the layer grid axis, so the default double-buffering prefetches the
        # next layer's weights while the current layer computes.
        return pl.BlockSpec((1,) + arr.shape[1:],
                            lambda b, l, _nd=ndim: (l,) + (0,) * (_nd - 1))

    return pl.pallas_call(
        partial(blocks_kernel, num_heads=num_heads),
        out_shape=jax.ShapeDtypeStruct((B, N, E), jnp.float32),
        grid=(B, depth),
        in_specs=[pl.BlockSpec((1, N, E), lambda b, l: (b, 0, 0))]
                 + [wspec(bp[kname]) for kname in _BLOCK_WEIGHT_KEYS],
        out_specs=pl.BlockSpec((1, N, E), lambda b, l: (b, 0, 0)),
        scratch_shapes=[pltpu.VMEM((N, E), jnp.float32),    # residual stream
                        pltpu.VMEM((N, E), jnp.bfloat16)],  # merged attention heads
        compiler_params=pltpu.CompilerParams(
            dimension_semantics=("parallel", "arbitrary")),
    )(x, *[bp[kname] for kname in _BLOCK_WEIGHT_KEYS])


# ---------------------------------------------------------------------------
# Kernel 3: encoder final LayerNorm (on the cls token) + classification head
#           Linear -> LayerNorm -> ReLU -> Linear (output lane-padded to 128)
# ---------------------------------------------------------------------------
def head_kernel(cls_ref, encw_ref, encb_ref, w1_ref, b1_ref,
                lnw_ref, lnb_ref, w2_ref, b2_ref, out_ref):
    x = _layernorm(cls_ref[...], encw_ref[...], encb_ref[...])   # encoder .norm
    h = _mm(x, w1_ref[...]) + b1_ref[...]
    h = _layernorm(h, lnw_ref[...], lnb_ref[...])
    h = jnp.maximum(h, 0.0)
    out_ref[...] = _mm(h, w2_ref[...]) + b2_ref[...]


def classifier_head(cls, p):
    B, _ = cls.shape
    out_pad = p["w2"].shape[1]
    vmem = pl.BlockSpec(memory_space=pltpu.MemorySpace.VMEM)
    return pl.pallas_call(
        head_kernel,
        out_shape=jax.ShapeDtypeStruct((B, out_pad), jnp.float32),
        in_specs=[vmem] * 9,
        out_specs=vmem,
    )(cls, p["enc_norm_w"], p["enc_norm_b"], p["w1"], p["b1"],
      p["ln_w"], p["ln_b"], p["w2"], p["b2"])


# ---------------------------------------------------------------------------
# Full forward (glue: patch extraction, cls concat, head de-padding)
# ---------------------------------------------------------------------------
def prithvi_classifier_forward(x_nchw, params, cfg):
    B, C, H, W = x_nchw.shape
    p = cfg["patch_size"]
    Hp, Wp = H // p, W // p
    E = cfg["embed_dim"]

    # TODO(synk): like the PyTorch module, T=1 is hardcoded via x[:, :, None];
    # num_frames/tubelet_size must be 1 for this classifier path.
    x = x_nchw[:, :, None, :, :]                    # (B, C, T=1, H, W)
    T = x.shape[2]
    # extract non-overlapping patches: (c, dh, dw) feature order matches
    # Conv3d(kernel=stride=(1,p,p)) weight flatten order
    patches = x.reshape(B, C, T, Hp, p, Wp, p)
    patches = jnp.transpose(patches, (0, 2, 3, 5, 1, 4, 6))  # (B,T,Hp,Wp,C,p,p)
    patches = patches.reshape(B, T * Hp * Wp, C * p * p)

    tokens = patch_embed(patches, params["proj_w"], params["proj_b"],
                         params["pos_patch"])                # (B, L, E)

    cls_tok = params["cls_token"] + params["pos_cls"]        # (1, E)
    cls_tok = jnp.broadcast_to(cls_tok[None], (B, 1, E))
    tok = jnp.concatenate([cls_tok, tokens], axis=1)         # (B, N, E)

    tok = transformer_blocks(tok, params["blocks"], cfg["num_heads"])

    cls = tok[:, 0, :]                                       # final LN applied in head kernel
    logits = classifier_head(cls, params["head"])            # (B, out_pad) lane-dense
    return logits[:, :cfg["output_dim"]]


# ---------------------------------------------------------------------------
# Deterministic parameter construction (weights bf16, biases/LN/pos f32)
# ---------------------------------------------------------------------------
def build_params(key, cfg):
    C, p, E = cfg["in_chans"], cfg["patch_size"], cfg["embed_dim"]
    Hp = cfg["img_size"] // p
    depth, out_dim = cfg["depth"], cfg["output_dim"]
    hidden = int(E * cfg["mlp_ratio"])
    K = C * cfg["tubelet_size"] * p * p
    grid = (cfg["num_frames"] // cfg["tubelet_size"], Hp, Hp)

    keys = jax.random.split(key, 3 + depth * 4 + 2)
    ki = iter(keys)

    def xavier(k, fan_in, fan_out, dtype=jnp.bfloat16):
        lim = math.sqrt(6.0 / (fan_in + fan_out))
        return jax.random.uniform(k, (fan_in, fan_out), jnp.float32, -lim, lim).astype(dtype)

    pos = get_3d_sincos_pos_embed(E, grid, cls_token=True).astype(np.float32)

    params = {
        "proj_w": xavier(next(ki), K, E),                       # Conv3d as matmul weight (bf16)
        "proj_b": 0.02 * jax.random.normal(next(ki), (1, E), jnp.float32),
        "cls_token": 0.02 * jax.random.normal(next(ki), (1, E), jnp.float32),
        "pos_cls": jnp.asarray(pos[:1]),
        "pos_patch": jnp.asarray(pos[1:]),
    }

    # per-layer weights stacked along a leading `depth` axis (grid-indexed)
    qkv_w = jnp.stack([xavier(next(ki), E, 3 * E) for _ in range(depth)])
    proj_w = jnp.stack([xavier(next(ki), E, E) for _ in range(depth)])
    fc1_w = jnp.stack([xavier(next(ki), E, hidden) for _ in range(depth)])
    fc2_w = jnp.stack([xavier(next(ki), hidden, E) for _ in range(depth)])
    params["blocks"] = {
        "ln1_w": jnp.ones((depth, 1, E), jnp.float32),
        "ln1_b": jnp.zeros((depth, 1, E), jnp.float32),
        "qkv_w": qkv_w,
        "qkv_b": jnp.zeros((depth, 1, 3 * E), jnp.float32),
        "proj_w": proj_w,
        "proj_b": jnp.zeros((depth, 1, E), jnp.float32),
        "ln2_w": jnp.ones((depth, 1, E), jnp.float32),
        "ln2_b": jnp.zeros((depth, 1, E), jnp.float32),
        "fc1_w": fc1_w,
        "fc1_b": jnp.zeros((depth, 1, hidden), jnp.float32),
        "fc2_w": fc2_w,
        "fc2_b": jnp.zeros((depth, 1, E), jnp.float32),
    }

    # classification head; final Linear lane-padded to a multiple of 128 cols
    out_pad = ((out_dim + 127) // 128) * 128
    w2 = xavier(next(ki), E // 2, out_dim, jnp.float32)
    w2 = jnp.pad(w2, ((0, 0), (0, out_pad - out_dim))).astype(jnp.bfloat16)
    params["head"] = {
        "enc_norm_w": jnp.ones((1, E), jnp.float32),
        "enc_norm_b": jnp.zeros((1, E), jnp.float32),
        "w1": xavier(next(ki), E, E // 2),
        "b1": jnp.zeros((1, E // 2), jnp.float32),
        "ln_w": jnp.ones((1, E // 2), jnp.float32),
        "ln_b": jnp.zeros((1, E // 2), jnp.float32),
        "w2": w2,
        "b2": jnp.zeros((1, out_pad), jnp.float32),
    }
    return params


if __name__ == "__main__":
    cfg = dict(img_size=16, patch_size=8, num_frames=1, tubelet_size=1,
               in_chans=4, embed_dim=32, depth=2, num_heads=4,
               output_dim=1, mlp_ratio=4.0)

    key = jax.random.PRNGKey(0)
    pkey, xkey = jax.random.split(key)
    params = build_params(pkey, cfg)

    x = jax.random.normal(
        xkey, (2, cfg["in_chans"], cfg["img_size"], cfg["img_size"]), jnp.float32)

    fwd = jax.jit(lambda xx, pp: prithvi_classifier_forward(xx, pp, cfg))
    out = jax.block_until_ready(fwd(x, params))
    assert out.shape == (2, cfg["output_dim"]), out.shape
    assert bool(jnp.all(jnp.isfinite(out)))
    print("KERNEL_OK")
</pallas_src>

<mosaic_0001>
module attributes {stable_mosaic.version = 11 : i64} {
  func.func @patch_embed_kernel(%arg0: i32, %arg1: memref<1x4x256xf32, #tpu.memory_space<vmem>>, %arg2: memref<256x32xbf16, #tpu.memory_space<vmem>>, %arg3: memref<1x32xf32, #tpu.memory_space<vmem>>, %arg4: memref<4x32xf32, #tpu.memory_space<vmem>>, %arg5: memref<1x4x32xf32, #tpu.memory_space<vmem>>) attributes {dimension_semantics = [#tpu.dimension_semantics<parallel>], iteration_bounds = array<i64: 2>, scalar_prefetch = 0 : i64, scratch_operands = 0 : i64, tpu.core_type = #tpu.core_type<tc>, window_params = [{transform_indices = @transform_0, window_bounds = array<i64: 1, 4, 256>}, {pipeline_mode = #tpu.pipeline_mode<synchronous>, transform_indices = @transform_1, window_bounds = array<i64: 256, 32>}, {pipeline_mode = #tpu.pipeline_mode<synchronous>, transform_indices = @transform_2, window_bounds = array<i64: 1, 32>}, {pipeline_mode = #tpu.pipeline_mode<synchronous>, transform_indices = @transform_3, window_bounds = array<i64: 4, 32>}, {transform_indices = @transform_4, window_bounds = array<i64: 1, 4, 32>}]} {
    %c0 = arith.constant 0 : index
    %c0_0 = arith.constant 0 : index
    %c0_1 = arith.constant 0 : index
    %0 = vector.load %arg1[%c0, %c0_0, %c0_1] : memref<1x4x256xf32, #tpu.memory_space<vmem>>, vector<1x4x256xf32>
    %1 = vector.shape_cast %0 : vector<1x4x256xf32> to vector<4x256xf32>
    %c0_2 = arith.constant 0 : index
    %c0_3 = arith.constant 0 : index
    %2 = vector.load %arg2[%c0_2, %c0_3] : memref<256x32xbf16, #tpu.memory_space<vmem>>, vector<256x32xbf16>
    %3 = arith.truncf %1 : vector<4x256xf32> to vector<4x256xbf16>
    %cst = arith.constant dense<0.000000e+00> : vector<4x32xf32>
    %4 = tpu.matmul %3, %2, %cst {dimension_numbers = #tpu.dot_dimension_numbers<[1], [0], [0], [1], [0, 0, 1, 1], [], []>} : vector<4x256xbf16>, vector<256x32xbf16>, vector<4x32xf32> -> vector<4x32xf32>
    %c0_4 = arith.constant 0 : index
    %c0_5 = arith.constant 0 : index
    %5 = vector.load %arg3[%c0_4, %c0_5] : memref<1x32xf32, #tpu.memory_space<vmem>>, vector<1x32xf32>
    %6 = vector.broadcast %5 : vector<1x32xf32> to vector<4x32xf32>
    %7 = arith.addf %4, %6 : vector<4x32xf32>
    %c0_6 = arith.constant 0 : index
    %c0_7 = arith.constant 0 : index
    %8 = vector.load %arg4[%c0_6, %c0_7] : memref<4x32xf32, #tpu.memory_space<vmem>>, vector<4x32xf32>
    %9 = arith.addf %7, %8 : vector<4x32xf32>
    %c0_8 = arith.constant 0 : index
    %c0_9 = arith.constant 0 : index
    %c0_10 = arith.constant 0 : index
    %10 = vector.load %arg5[%c0_8, %c0_9, %c0_10] : memref<1x4x32xf32, #tpu.memory_space<vmem>>, vector<1x4x32xf32>
    %11 = vector.shape_cast %10 : vector<1x4x32xf32> to vector<4x32xf32>
    %12 = vector.shape_cast %9 : vector<4x32xf32> to vector<1x4x32xf32>
    tpu.vector_store %arg5[%c0_8, %c0_9, %c0_10], %12 {strides = array<i32>} : memref<1x4x32xf32, #tpu.memory_space<vmem>>, vector<1x4x32xf32>,
    return
  }
  func.func @transform_0(%arg0: i32) -> (i32, i32, i32) {
    %c0_i32 = arith.constant 0 : i32
    %c0_i32_0 = arith.constant 0 : i32
    %c0_i32_1 = arith.constant 0 : i32
    return %arg0, %c0_i32, %c0_i32_0 : i32, i32, i32
  }
  func.func @transform_1(%arg0: i32) -> (i32, i32) {
    %c0_i32 = arith.constant 0 : i32
    %c0_i32_0 = arith.constant 0 : i32
    %c0_i32_1 = arith.constant 0 : i32
    return %c0_i32, %c0_i32_0 : i32, i32
  }
  func.func @transform_2(%arg0: i32) -> (i32, i32) {
    %c0_i32 = arith.constant 0 : i32
    %c0_i32_0 = arith.constant 0 : i32
    %c0_i32_1 = arith.constant 0 : i32
    return %c0_i32, %c0_i32_0 : i32, i32
  }
  func.func @transform_3(%arg0: i32) -> (i32, i32) {
    %c0_i32 = arith.constant 0 : i32
    %c0_i32_0 = arith.constant 0 : i32
    %c0_i32_1 = arith.constant 0 : i32
    return %c0_i32, %c0_i32_0 : i32, i32
  }
  func.func @transform_4(%arg0: i32) -> (i32, i32, i32) {
    %c0_i32 = arith.constant 0 : i32
    %c0_i32_0 = arith.constant 0 : i32
    %c0_i32_1 = arith.constant 0 : i32
    return %arg0, %c0_i32, %c0_i32_0 : i32, i32, i32
  }
}

module attributes {stable_mosaic.version = 11 : i64} {
  func.func @blocks_kernel(%arg0: i32, %arg1: i32, %arg2: memref<1x5x32xf32, #tpu.memory_space<vmem>>, %arg3: memref<1x1x32xf32, #tpu.memory_space<vmem>>, %arg4: memref<1x1x32xf32, #tpu.memory_space<vmem>>, %arg5: memref<1x32x96xbf16, #tpu.memory_space<vmem>>, %arg6: memref<1x1x96xf32, #tpu.memory_space<vmem>>, %arg7: memref<1x32x32xbf16, #tpu.memory_space<vmem>>, %arg8: memref<1x1x32xf32, #tpu.memory_space<vmem>>, %arg9: memref<1x1x32xf32, #tpu.memory_space<vmem>>, %arg10: memref<1x1x32xf32, #tpu.memory_space<vmem>>, %arg11: memref<1x32x128xbf16, #tpu.memory_space<vmem>>, %arg12: memref<1x1x128xf32, #tpu.memory_space<vmem>>, %arg13: memref<1x128x32xbf16, #tpu.memory_space<vmem>>, %arg14: memref<1x1x32xf32, #tpu.memory_space<vmem>>, %arg15: memref<1x5x32xf32, #tpu.memory_space<vmem>>, %arg16: memref<5x32xf32, #tpu.memory_space<vmem>>, %arg17: memref<5x32xbf16, #tpu.memory_space<vmem>>) attributes {dimension_semantics = [#tpu.dimension_semantics<parallel>, #tpu.dimension_semantics<arbitrary>], iteration_bounds = array<i64: 2, 2>, scalar_prefetch = 0 : i64, scratch_operands = 2 : i64, tpu.core_type = #tpu.core_type<tc>, window_params = [{transform_indices = @transform_0, window_bounds = array<i64: 1, 5, 32>}, {transform_indices = @transform_1, window_bounds = array<i64: 1, 1, 32>}, {transform_indices = @transform_2, window_bounds = array<i64: 1, 1, 32>}, {transform_indices = @transform_3, window_bounds = array<i64: 1, 32, 96>}, {transform_indices = @transform_4, window_bounds = array<i64: 1, 1, 96>}, {transform_indices = @transform_5, window_bounds = array<i64: 1, 32, 32>}, {transform_indices = @transform_6, window_bounds = array<i64: 1, 1, 32>}, {transform_indices = @transform_7, window_bounds = array<i64: 1, 1, 32>}, {transform_indices = @transform_8, window_bounds = array<i64: 1, 1, 32>}, {transform_indices = @transform_9, window_bounds = array<i64: 1, 32, 128>}, {transform_indices = @transform_10, window_bounds = array<i64: 1, 1, 128>}, {transform_indices = @transform_11, window_bounds = array<i64: 1, 128, 32>}, {transform_indices = @transform_12, window_bounds = array<i64: 1, 1, 32>}, {transform_indices = @transform_13, window_bounds = array<i64: 1, 5, 32>}]} {
    %c0_i32 = arith.constant 0 : i32
    %0 = arith.cmpi eq, %arg1, %c0_i32 : i32
    %1 = arith.extui %0 : i1 to i32
    %c0_i32_0 = arith.constant 0 : i32
    %2 = arith.cmpi ne, %1, %c0_i32_0 : i32
    scf.if %2 {
      %c0_70 = arith.constant 0 : index
      %c0_71 = arith.constant 0 : index
      %c0_72 = arith.constant 0 : index
      %167 = vector.load %arg2[%c0_70, %c0_71, %c0_72] : memref<1x5x32xf32, #tpu.memory_space<vmem>>, vector<1x5x32xf32>
      %168 = vector.shape_cast %167 : vector<1x5x32xf32> to vector<5x32xf32>
      %c0_73 = arith.constant 0 : index
      %c0_74 = arith.constant 0 : index
      %169 = vector.load %arg16[%c0_73, %c0_74] : memref<5x32xf32, #tpu.memory_space<vmem>>, vector<5x32xf32>
      tpu.vector_store %arg16[%c0_73, %c0_74], %168 {strides = array<i32>} : memref<5x32xf32, #tpu.memory_space<vmem>>, vector<5x32xf32>,
    } else {
    }
    %c0 = arith.constant 0 : index
    %c0_1 = arith.constant 0 : index
    %3 = vector.load %arg16[%c0, %c0_1] : memref<5x32xf32, #tpu.memory_space<vmem>>, vector<5x32xf32>
    %c0_2 = arith.constant 0 : index
    %c0_3 = arith.constant 0 : index
    %c0_4 = arith.constant 0 : index
    %4 = vector.load %arg3[%c0_2, %c0_3, %c0_4] : memref<1x1x32xf32, #tpu.memory_space<vmem>>, vector<1x1x32xf32>
    %5 = vector.shape_cast %4 : vector<1x1x32xf32> to vector<1x32xf32>
    %c0_5 = arith.constant 0 : index
    %c0_6 = arith.constant 0 : index
    %c0_7 = arith.constant 0 : index
    %6 = vector.load %arg4[%c0_5, %c0_6, %c0_7] : memref<1x1x32xf32, #tpu.memory_space<vmem>>, vector<1x1x32xf32>
    %7 = vector.shape_cast %6 : vector<1x1x32xf32> to vector<1x32xf32>
    %cst = arith.constant dense<0.000000e+00> : vector<5xf32>
    %8 = vector.multi_reduction <add>, %3, %cst [1] : vector<5x32xf32> to vector<5xf32>
    %9 = vector.shape_cast %8 : vector<5xf32> to vector<5x1xf32>
    %cst_8 = arith.constant 3.200000e+01 : f32
    %10 = vector.broadcast %cst_8 : f32 to vector<5x1xf32>
    %11 = arith.divf %9, %10 : vector<5x1xf32>
    %12 = vector.broadcast %11 : vector<5x1xf32> to vector<5x32xf32>
    %13 = arith.subf %3, %12 : vector<5x32xf32>
    %14 = arith.mulf %13, %13 : vector<5x32xf32>
    %cst_9 = arith.constant dense<0.000000e+00> : vector<5xf32>
    %15 = vector.multi_reduction <add>, %14, %cst_9 [1] : vector<5x32xf32> to vector<5xf32>
    %16 = vector.shape_cast %15 : vector<5xf32> to vector<5x1xf32>
    %cst_10 = arith.constant 3.200000e+01 : f32
    %17 = vector.broadcast %cst_10 : f32 to vector<5x1xf32>
    %18 = arith.divf %16, %17 : vector<5x1xf32>
    %cst_11 = arith.constant 9.99999974E-6 : f32
    %19 = vector.broadcast %cst_11 : f32 to vector<5x1xf32>
    %20 = arith.addf %18, %19 : vector<5x1xf32>
    %21 = math.rsqrt %20 : vector<5x1xf32>
    %22 = vector.broadcast %21 : vector<5x1xf32> to vector<5x32xf32>
    %23 = arith.mulf %13, %22 : vector<5x32xf32>
    %24 = vector.broadcast %5 : vector<1x32xf32> to vector<5x32xf32>
    %25 = arith.mulf %23, %24 : vector<5x32xf32>
    %26 = vector.broadcast %7 : vector<1x32xf32> to vector<5x32xf32>
    %27 = arith.addf %25, %26 : vector<5x32xf32>
    %c0_12 = arith.constant 0 : index
    %c0_13 = arith.constant 0 : index
    %c0_14 = arith.constant 0 : index
    %28 = vector.load %arg5[%c0_12, %c0_13, %c0_14] : memref<1x32x96xbf16, #tpu.memory_space<vmem>>, vector<1x32x96xbf16>
    %29 = vector.shape_cast %28 : vector<1x32x96xbf16> to vector<32x96xbf16>
    %30 = arith.truncf %27 : vector<5x32xf32> to vector<5x32xbf16>
    %cst_15 = arith.constant dense<0.000000e+00> : vector<5x96xf32>
    %31 = tpu.matmul %30, %29, %cst_15 {dimension_numbers = #tpu.dot_dimension_numbers<[1], [0], [0], [1], [0, 0, 1, 1], [], []>} : vector<5x32xbf16>, vector<32x96xbf16>, vector<5x96xf32> -> vector<5x96xf32>
    %c0_16 = arith.constant 0 : index
    %c0_17 = arith.constant 0 : index
    %c0_18 = arith.constant 0 : index
    %32 = vector.load %arg6[%c0_16, %c0_17, %c0_18] : memref<1x1x96xf32, #tpu.memory_space<vmem>>, vector<1x1x96xf32>
    %33 = vector.shape_cast %32 : vector<1x1x96xf32> to vector<1x96xf32>
    %34 = vector.broadcast %33 : vector<1x96xf32> to vector<5x96xf32>
    %35 = arith.addf %31, %34 : vector<5x96xf32>
    %36 = vector.extract_strided_slice %35 {offsets = [0, 0], sizes = [5, 32], strides = [1, 1]} : vector<5x96xf32> to vector<5x32xf32>
    %cst_19 = arith.constant 0.353553385 : f32
    %37 = vector.broadcast %cst_19 : f32 to vector<5x32xf32>
    %38 = arith.mulf %36, %37 : vector<5x32xf32>
    %39 = vector.extract_strided_slice %35 {offsets = [0, 32], sizes = [5, 32], strides = [1, 1]} : vector<5x96xf32> to vector<5x32xf32>
    %40 = vector.extract_strided_slice %35 {offsets = [0, 64], sizes = [5, 32], strides = [1, 1]} : vector<5x96xf32> to vector<5x32xf32>
    %41 = vector.extract_strided_slice %38 {offsets = [0, 0], sizes = [5, 8], strides = [1, 1]} : vector<5x32xf32> to vector<5x8xf32>
    %42 = vector.extract_strided_slice %38 {offsets = [0, 8], sizes = [5, 8], strides = [1, 1]} : vector<5x32xf32> to vector<5x8xf32>
    %43 = vector.extract_strided_slice %38 {offsets = [0, 16], sizes = [5, 8], strides = [1, 1]} : vector<5x32xf32> to vector<5x8xf32>
    %44 = vector.extract_strided_slice %38 {offsets = [0, 24], sizes = [5, 8], strides = [1, 1]} : vector<5x32xf32> to vector<5x8xf32>
    %45 = vector.shape_cast %41 : vector<5x8xf32> to vector<1x5x8xf32>
    %46 = vector.shape_cast %42 : vector<5x8xf32> to vector<1x5x8xf32>
    %47 = vector.shape_cast %43 : vector<5x8xf32> to vector<1x5x8xf32>
    %48 = vector.shape_cast %44 : vector<5x8xf32> to vector<1x5x8xf32>
    %49 = tpu.concatenate %45, %46, %47, %48 in 0 : vector<1x5x8xf32>, vector<1x5x8xf32>, vector<1x5x8xf32>, vector<1x5x8xf32> -> vector<4x5x8xf32>
    %50 = arith.truncf %49 : vector<4x5x8xf32> to vector<4x5x8xbf16>
    %51 = vector.extract_strided_slice %39 {offsets = [0, 0], sizes = [5, 8], strides = [1, 1]} : vector<5x32xf32> to vector<5x8xf32>
    %52 = vector.extract_strided_slice %39 {offsets = [0, 8], sizes = [5, 8], strides = [1, 1]} : vector<5x32xf32> to vector<5x8xf32>
    %53 = vector.extract_strided_slice %39 {offsets = [0, 16], sizes = [5, 8], strides = [1, 1]} : vector<5x32xf32> to vector<5x8xf32>
    %54 = vector.extract_strided_slice %39 {offsets = [0, 24], sizes = [5, 8], strides = [1, 1]} : vector<5x32xf32> to vector<5x8xf32>
    %55 = vector.shape_cast %51 : vector<5x8xf32> to vector<1x5x8xf32>
    %56 = vector.shape_cast %52 : vector<5x8xf32> to vector<1x5x8xf32>
    %57 = vector.shape_cast %53 : vector<5x8xf32> to vector<1x5x8xf32>
    %58 = vector.shape_cast %54 : vector<5x8xf32> to vector<1x5x8xf32>
    %59 = tpu.concatenate %55, %56, %57, %58 in 0 : vector<1x5x8xf32>, vector<1x5x8xf32>, vector<1x5x8xf32>, vector<1x5x8xf32> -> vector<4x5x8xf32>
    %60 = arith.truncf %59 : vector<4x5x8xf32> to vector<4x5x8xbf16>
    %61 = vector.extract_strided_slice %40 {offsets = [0, 0], sizes = [5, 8], strides = [1, 1]} : vector<5x32xf32> to vector<5x8xf32>
    %62 = vector.extract_strided_slice %40 {offsets = [0, 8], sizes = [5, 8], strides = [1, 1]} : vector<5x32xf32> to vector<5x8xf32>
    %63 = vector.extract_strided_slice %40 {offsets = [0, 16], sizes = [5, 8], strides = [1, 1]} : vector<5x32xf32> to vector<5x8xf32>
    %64 = vector.extract_strided_slice %40 {offsets = [0, 24], sizes = [5, 8], strides = [1, 1]} : vector<5x32xf32> to vector<5x8xf32>
    %65 = vector.shape_cast %61 : vector<5x8xf32> to vector<1x5x8xf32>
    %66 = vector.shape_cast %62 : vector<5x8xf32> to vector<1x5x8xf32>
    %67 = vector.shape_cast %63 : vector<5x8xf32> to vector<1x5x8xf32>
    %68 = vector.shape_cast %64 : vector<5x8xf32> to vector<1x5x8xf32>
    %69 = tpu.concatenate %65, %66, %67, %68 in 0 : vector<1x5x8xf32>, vector<1x5x8xf32>, vector<1x5x8xf32>, vector<1x5x8xf32> -> vector<4x5x8xf32>
    %70 = arith.truncf %69 : vector<4x5x8xf32> to vector<4x5x8xbf16>
    %cst_20 = arith.constant dense<0.000000e+00> : vector<4x5x5xf32>
    %71 = tpu.matmul %50, %60, %cst_20 {dimension_numbers = #tpu.dot_dimension_numbers<[2], [2], [1], [1], [0, 0, 0, 1, 1, 1], [0], [0]>} : vector<4x5x8xbf16>, vector<4x5x8xbf16>, vector<4x5x5xf32> -> vector<4x5x5xf32>
    %cst_21 = arith.constant dense<0xFF800000> : vector<4x5xf32>
    %72 = vector.multi_reduction <maximumf>, %71, %cst_21 [2] : vector<4x5x5xf32> to vector<4x5xf32>
    %73 = vector.shape_cast %72 : vector<4x5xf32> to vector<4x5x1xf32>
    %74 = vector.broadcast %73 : vector<4x5x1xf32> to vector<4x5x5xf32>
    %75 = arith.subf %71, %74 : vector<4x5x5xf32>
    %76 = math.exp %75 : vector<4x5x5xf32>
    %cst_22 = arith.constant dense<0.000000e+00> : vector<4x5xf32>
    %77 = vector.multi_reduction <add>, %76, %cst_22 [2] : vector<4x5x5xf32> to vector<4x5xf32>
    %78 = vector.shape_cast %77 : vector<4x5xf32> to vector<4x5x1xf32>
    %79 = tpu.reciprocal %78 {approx = true} : vector<4x5x1xf32> -> vector<4x5x1xf32>
    %80 = vector.broadcast %79 : vector<4x5x1xf32> to vector<4x5x5xf32>
    %81 = arith.mulf %76, %80 : vector<4x5x5xf32>
    %82 = arith.truncf %81 : vector<4x5x5xf32> to vector<4x5x5xbf16>
    %cst_23 = arith.constant dense<0.000000e+00> : vector<4x5x8xf32>
    %83 = tpu.matmul %82, %70, %cst_23 {dimension_numbers = #tpu.dot_dimension_numbers<[2], [1], [1], [2], [0, 0, 0, 1, 1, 2], [0], [0]>} : vector<4x5x5xbf16>, vector<4x5x8xbf16>, vector<4x5x8xf32> -> vector<4x5x8xf32>
    %84 = vector.extract_strided_slice %83 {offsets = [0, 0, 0], sizes = [1, 5, 8], strides = [1, 1, 1]} : vector<4x5x8xf32> to vector<1x5x8xf32>
    %85 = vector.shape_cast %84 : vector<1x5x8xf32> to vector<5x8xf32>
    %86 = arith.truncf %85 : vector<5x8xf32> to vector<5x8xbf16>
    %c0_24 = arith.constant 0 : index
    %c0_25 = arith.constant 0 : index
    %87 = vector.load %arg17[%c0_24, %c0_25] : memref<5x32xbf16, #tpu.memory_space<vmem>>, vector<5x8xbf16>
    tpu.vector_store %arg17[%c0_24, %c0_25], %86 {strides = array<i32>} : memref<5x32xbf16, #tpu.memory_space<vmem>>, vector<5x8xbf16>,
    %88 = vector.extract_strided_slice %83 {offsets = [1, 0, 0], sizes = [1, 5, 8], strides = [1, 1, 1]} : vector<4x5x8xf32> to vector<1x5x8xf32>
    %89 = vector.shape_cast %88 : vector<1x5x8xf32> to vector<5x8xf32>
    %90 = arith.truncf %89 : vector<5x8xf32> to vector<5x8xbf16>
    %c0_26 = arith.constant 0 : index
    %c8 = arith.constant 8 : index
    %91 = vector.load %arg17[%c0_26, %c8] : memref<5x32xbf16, #tpu.memory_space<vmem>>, vector<5x8xbf16>
    tpu.vector_store %arg17[%c0_26, %c8], %90 {strides = array<i32>} : memref<5x32xbf16, #tpu.memory_space<vmem>>, vector<5x8xbf16>,
    %92 = vector.extract_strided_slice %83 {offsets = [2, 0, 0], sizes = [1, 5, 8], strides = [1, 1, 1]} : vector<4x5x8xf32> to vector<1x5x8xf32>
    %93 = vector.shape_cast %92 : vector<1x5x8xf32> to vector<5x8xf32>
    %94 = arith.truncf %93 : vector<5x8xf32> to vector<5x8xbf16>
    %c0_27 = arith.constant 0 : index
    %c16 = arith.constant 16 : index
    %95 = vector.load %arg17[%c0_27, %c16] : memref<5x32xbf16, #tpu.memory_space<vmem>>, vector<5x8xbf16>
    tpu.vector_store %arg17[%c0_27, %c16], %94 {strides = array<i32>} : memref<5x32xbf16, #tpu.memory_space<vmem>>, vector<5x8xbf16>,
    %96 = vector.extract_strided_slice %83 {offsets = [3, 0, 0], sizes = [1, 5, 8], strides = [1, 1, 1]} : vector<4x5x8xf32> to vector<1x5x8xf32>
    %97 = vector.shape_cast %96 : vector<1x5x8xf32> to vector<5x8xf32>
    %98 = arith.truncf %97 : vector<5x8xf32> to vector<5x8xbf16>
    %c0_28 = arith.constant 0 : index
    %c24 = arith.constant 24 : index
    %99 = vector.load %arg17[%c0_28, %c24] : memref<5x32xbf16, #tpu.memory_space<vmem>>, vector<5x8xbf16>
    tpu.vector_store %arg17[%c0_28, %c24], %98 {strides = array<i32>} : memref<5x32xbf16, #tpu.memory_space<vmem>>, vector<5x8xbf16>,
    %c0_29 = arith.constant 0 : index
    %c0_30 = arith.constant 0 : index
    %100 = vector.load %arg17[%c0_29, %c0_30] : memref<5x32xbf16, #tpu.memory_space<vmem>>, vector<5x32xbf16>
    %c0_31 = arith.constant 0 : index
    %c0_32 = arith.constant 0 : index
    %c0_33 = arith.constant 0 : index
    %101 = vector.load %arg7[%c0_31, %c0_32, %c0_33] : memref<1x32x32xbf16, #tpu.memory_space<vmem>>, vector<1x32x32xbf16>
    %102 = vector.shape_cast %101 : vector<1x32x32xbf16> to vector<32x32xbf16>
    %cst_34 = arith.constant dense<0.000000e+00> : vector<5x32xf32>
    %103 = tpu.matmul %100, %102, %cst_34 {dimension_numbers = #tpu.dot_dimension_numbers<[1], [0], [0], [1], [0, 0, 1, 1], [], []>} : vector<5x32xbf16>, vector<32x32xbf16>, vector<5x32xf32> -> vector<5x32xf32>
    %c0_35 = arith.constant 0 : index
    %c0_36 = arith.constant 0 : index
    %c0_37 = arith.constant 0 : index
    %104 = vector.load %arg8[%c0_35, %c0_36, %c0_37] : memref<1x1x32xf32, #tpu.memory_space<vmem>>, vector<1x1x32xf32>
    %105 = vector.shape_cast %104 : vector<1x1x32xf32> to vector<1x32xf32>
    %106 = vector.broadcast %105 : vector<1x32xf32> to vector<5x32xf32>
    %107 = arith.addf %103, %106 : vector<5x32xf32>
    %108 = arith.addf %3, %107 : vector<5x32xf32>
    %c0_38 = arith.constant 0 : index
    %c0_39 = arith.constant 0 : index
    %c0_40 = arith.constant 0 : index
    %109 = vector.load %arg9[%c0_38, %c0_39, %c0_40] : memref<1x1x32xf32, #tpu.memory_space<vmem>>, vector<1x1x32xf32>
    %110 = vector.shape_cast %109 : vector<1x1x32xf32> to vector<1x32xf32>
    %c0_41 = arith.constant 0 : index
    %c0_42 = arith.constant 0 : index
    %c0_43 = arith.constant 0 : index
    %111 = vector.load %arg10[%c0_41, %c0_42, %c0_43] : memref<1x1x32xf32, #tpu.memory_space<vmem>>, vector<1x1x32xf32>
    %112 = vector.shape_cast %111 : vector<1x1x32xf32> to vector<1x32xf32>
    %cst_44 = arith.constant dense<0.000000e+00> : vector<5xf32>
    %113 = vector.multi_reduction <add>, %108, %cst_44 [1] : vector<5x32xf32> to vector<5xf32>
    %114 = vector.shape_cast %113 : vector<5xf32> to vector<5x1xf32>
    %cst_45 = arith.constant 3.200000e+01 : f32
    %115 = vector.broadcast %cst_45 : f32 to vector<5x1xf32>
    %116 = arith.divf %114, %115 : vector<5x1xf32>
    %117 = vector.broadcast %116 : vector<5x1xf32> to vector<5x32xf32>
    %118 = arith.subf %108, %117 : vector<5x32xf32>
    %119 = arith.mulf %118, %118 : vector<5x32xf32>
    %cst_46 = arith.constant dense<0.000000e+00> : vector<5xf32>
    %120 = vector.multi_reduction <add>, %119, %cst_46 [1] : vector<5x32xf32> to vector<5xf32>
    %121 = vector.shape_cast %120 : vector<5xf32> to vector<5x1xf32>
    %cst_47 = arith.constant 3.200000e+01 : f32
    %122 = vector.broadcast %cst_47 : f32 to vector<5x1xf32>
    %123 = arith.divf %121, %122 : vector<5x1xf32>
    %cst_48 = arith.constant 9.99999974E-6 : f32
    %124 = vector.broadcast %cst_48 : f32 to vector<5x1xf32>
    %125 = arith.addf %123, %124 : vector<5x1xf32>
    %126 = math.rsqrt %125 : vector<5x1xf32>
    %127 = vector.broadcast %126 : vector<5x1xf32> to vector<5x32xf32>
    %128 = arith.mulf %118, %127 : vector<5x32xf32>
    %129 = vector.broadcast %110 : vector<1x32xf32> to vector<5x32xf32>
    %130 = arith.mulf %128, %129 : vector<5x32xf32>
    %131 = vector.broadcast %112 : vector<1x32xf32> to vector<5x32xf32>
    %132 = arith.addf %130, %131 : vector<5x32xf32>
    %c0_49 = arith.constant 0 : index
    %c0_50 = arith.constant 0 : index
    %c0_51 = arith.constant 0 : index
    %133 = vector.load %arg11[%c0_49, %c0_50, %c0_51] : memref<1x32x128xbf16, #tpu.memory_space<vmem>>, vector<1x32x128xbf16>
    %134 = vector.shape_cast %133 : vector<1x32x128xbf16> to vector<32x128xbf16>
    %135 = arith.truncf %132 : vector<5x32xf32> to vector<5x32xbf16>
    %cst_52 = arith.constant dense<0.000000e+00> : vector<5x128xf32>
    %136 = tpu.matmul %135, %134, %cst_52 {dimension_numbers = #tpu.dot_dimension_numbers<[1], [0], [0], [1], [0, 0, 1, 1], [], []>} : vector<5x32xbf16>, vector<32x128xbf16>, vector<5x128xf32> -> vector<5x128xf32>
    %c0_53 = arith.constant 0 : index
    %c0_54 = arith.constant 0 : index
    %c0_55 = arith.constant 0 : index
    %137 = vector.load %arg12[%c0_53, %c0_54, %c0_55] : memref<1x1x128xf32, #tpu.memory_space<vmem>>, vector<1x1x128xf32>
    %138 = vector.shape_cast %137 : vector<1x1x128xf32> to vector<1x128xf32>
    %139 = vector.broadcast %138 : vector<1x128xf32> to vector<5x128xf32>
    %140 = arith.addf %136, %139 : vector<5x128xf32>
    %cst_56 = arith.constant 5.000000e-01 : f32
    %141 = vector.broadcast %cst_56 : f32 to vector<5x128xf32>
    %142 = arith.mulf %141, %140 : vector<5x128xf32>
    %cst_57 = arith.constant 4.471500e-02 : f32
    %143 = vector.broadcast %cst_57 : f32 to vector<5x128xf32>
    %144 = arith.mulf %143, %140 : vector<5x128xf32>
    %145 = arith.mulf %144, %140 : vector<5x128xf32>
    %146 = arith.mulf %145, %140 : vector<5x128xf32>
    %147 = arith.addf %140, %146 : vector<5x128xf32>
    %cst_58 = arith.constant 0.797884583 : f32
    %148 = vector.broadcast %cst_58 : f32 to vector<5x128xf32>
    %149 = arith.mulf %148, %147 : vector<5x128xf32>
    %150 = math.tanh %149 : vector<5x128xf32>
    %cst_59 = arith.constant 1.000000e+00 : f32
    %151 = vector.broadcast %cst_59 : f32 to vector<5x128xf32>
    %152 = arith.addf %151, %150 : vector<5x128xf32>
    %153 = arith.mulf %142, %152 : vector<5x128xf32>
    %c0_60 = arith.constant 0 : index
    %c0_61 = arith.constant 0 : index
    %c0_62 = arith.constant 0 : index
    %154 = vector.load %arg13[%c0_60, %c0_61, %c0_62] : memref<1x128x32xbf16, #tpu.memory_space<vmem>>, vector<1x128x32xbf16>
    %155 = vector.shape_cast %154 : vector<1x128x32xbf16> to vector<128x32xbf16>
    %156 = arith.truncf %153 : vector<5x128xf32> to vector<5x128xbf16>
    %cst_63 = arith.constant dense<0.000000e+00> : vector<5x32xf32>
    %157 = tpu.matmul %156, %155, %cst_63 {dimension_numbers = #tpu.dot_dimension_numbers<[1], [0], [0], [1], [0, 0, 1, 1], [], []>} : vector<5x128xbf16>, vector<128x32xbf16>, vector<5x32xf32> -> vector<5x32xf32>
    %c0_64 = arith.constant 0 : index
    %c0_65 = arith.constant 0 : index
    %c0_66 = arith.constant 0 : index
    %158 = vector.load %arg14[%c0_64, %c0_65, %c0_66] : memref<1x1x32xf32, #tpu.memory_space<vmem>>, vector<1x1x32xf32>
    %159 = vector.shape_cast %158 : vector<1x1x32xf32> to vector<1x32xf32>
    %160 = vector.broadcast %159 : vector<1x32xf32> to vector<5x32xf32>
    %161 = arith.addf %157, %160 : vector<5x32xf32>
    %162 = arith.addf %108, %161 : vector<5x32xf32>
    %c0_67 = arith.constant 0 : index
    %c0_68 = arith.constant 0 : index
    %163 = vector.load %arg16[%c0_67, %c0_68] : memref<5x32xf32, #tpu.memory_space<vmem>>, vector<5x32xf32>
    tpu.vector_store %arg16[%c0_67, %c0_68], %162 {strides = array<i32>} : memref<5x32xf32, #tpu.memory_space<vmem>>, vector<5x32xf32>,
    %c1_i32 = arith.constant 1 : i32
    %164 = arith.cmpi eq, %arg1, %c1_i32 : i32
    %165 = arith.extui %164 : i1 to i32
    %c0_i32_69 = arith.constant 0 : i32
    %166 = arith.cmpi ne, %165, %c0_i32_69 : i32
    scf.if %166 {
      %c0_70 = arith.constant 0 : index
      %c0_71 = arith.constant 0 : index
      %c0_72 = arith.constant 0 : index
      %167 = vector.load %arg15[%c0_70, %c0_71, %c0_72] : memref<1x5x32xf32, #tpu.memory_space<vmem>>, vector<1x5x32xf32>
      %168 = vector.shape_cast %167 : vector<1x5x32xf32> to vector<5x32xf32>
      %169 = vector.shape_cast %162 : vector<5x32xf32> to vector<1x5x32xf32>
      tpu.vector_store %arg15[%c0_70, %c0_71, %c0_72], %169 {strides = array<i32>} : memref<1x5x32xf32, #tpu.memory_space<vmem>>, vector<1x5x32xf32>,
    } else {
    }
    return
  }
  func.func @transform_0(%arg0: i32, %arg1: i32) -> (i32, i32, i32) {
    %c0_i32 = arith.constant 0 : i32
    %c0_i32_0 = arith.constant 0 : i32
    %c0_i32_1 = arith.constant 0 : i32
    return %arg0, %c0_i32, %c0_i32_0 : i32, i32, i32
  }
  func.func @transform_1(%arg0: i32, %arg1: i32) -> (i32, i32, i32) {
    %c0_i32 = arith.constant 0 : i32
    %c0_i32_0 = arith.constant 0 : i32
    %c0_i32_1 = arith.constant 0 : i32
    return %arg1, %c0_i32, %c0_i32_0 : i32, i32, i32
  }
  func.func @transform_2(%arg0: i32, %arg1: i32) -> (i32, i32, i32) {
    %c0_i32 = arith.constant 0 : i32
    %c0_i32_0 = arith.constant 0 : i32
    %c0_i32_1 = arith.constant 0 : i32
    return %arg1, %c0_i32, %c0_i32_0 : i32, i32, i32
  }
  func.func @transform_3(%arg0: i32, %arg1: i32) -> (i32, i32, i32) {
    %c0_i32 = arith.constant 0 : i32
    %c0_i32_0 = arith.constant 0 : i32
    %c0_i32_1 = arith.constant 0 : i32
    return %arg1, %c0_i32, %c0_i32_0 : i32, i32, i32
  }
  func.func @transform_4(%arg0: i32, %arg1: i32) -> (i32, i32, i32) {
    %c0_i32 = arith.constant 0 : i32
    %c0_i32_0 = arith.constant 0 : i32
    %c0_i32_1 = arith.constant 0 : i32
    return %arg1, %c0_i32, %c0_i32_0 : i32, i32, i32
  }
  func.func @transform_5(%arg0: i32, %arg1: i32) -> (i32, i32, i32) {
    %c0_i32 = arith.constant 0 : i32
    %c0_i32_0 = arith.constant 0 : i32
    %c0_i32_1 = arith.constant 0 : i32
    return %arg1, %c0_i32, %c0_i32_0 : i32, i32, i32
  }
  func.func @transform_6(%arg0: i32, %arg1: i32) -> (i32, i32, i32) {
    %c0_i32 = arith.constant 0 : i32
    %c0_i32_0 = arith.constant 0 : i32
    %c0_i32_1 = arith.constant 0 : i32
    return %arg1, %c0_i32, %c0_i32_0 : i32, i32, i32
  }
  func.func @transform_7(%arg0: i32, %arg1: i32) -> (i32, i32, i32) {
    %c0_i32 = arith.constant 0 : i32
    %c0_i32_0 = arith.constant 0 : i32
    %c0_i32_1 = arith.constant 0 : i32
    return %arg1, %c0_i32, %c0_i32_0 : i32, i32, i32
  }
  func.func @transform_8(%arg0: i32, %arg1: i32) -> (i32, i32, i32) {
    %c0_i32 = arith.constant 0 : i32
    %c0_i32_0 = arith.constant 0 : i32
    %c0_i32_1 = arith.constant 0 : i32
    return %arg1, %c0_i32, %c0_i32_0 : i32, i32, i32
  }
  func.func @transform_9(%arg0: i32, %arg1: i32) -> (i32, i32, i32) {
    %c0_i32 = arith.constant 0 : i32
    %c0_i32_0 = arith.constant 0 : i32
    %c0_i32_1 = arith.constant 0 : i32
    return %arg1, %c0_i32, %c0_i32_0 : i32, i32, i32
  }
  func.func @transform_10(%arg0: i32, %arg1: i32) -> (i32, i32, i32) {
    %c0_i32 = arith.constant 0 : i32
    %c0_i32_0 = arith.constant 0 : i32
    %c0_i32_1 = arith.constant 0 : i32
    return %arg1, %c0_i32, %c0_i32_0 : i32, i32, i32
  }
  func.func @transform_11(%arg0: i32, %arg1: i32) -> (i32, i32, i32) {
    %c0_i32 = arith.constant 0 : i32
    %c0_i32_0 = arith.constant 0 : i32
    %c0_i32_1 = arith.constant 0 : i32
    return %arg1, %c0_i32, %c0_i32_0 : i32, i32, i32
  }
  func.func @transform_12(%arg0: i32, %arg1: i32) -> (i32, i32, i32) {
    %c0_i32 = arith.constant 0 : i32
    %c0_i32_0 = arith.constant 0 : i32
    %c0_i32_1 = arith.constant 0 : i32
    return %arg1, %c0_i32, %c0_i32_0 : i32, i32, i32
  }
  func.func @transform_13(%arg0: i32, %arg1: i32) -> (i32, i32, i32) {
    %c0_i32 = arith.constant 0 : i32
    %c0_i32_0 = arith.constant 0 : i32
    %c0_i32_1 = arith.constant 0 : i32
    return %arg0, %c0_i32, %c0_i32_0 : i32, i32, i32
  }
}

module attributes {stable_mosaic.version = 11 : i64} {
  func.func @head_kernel(%arg0: memref<2x32xf32, #tpu.memory_space<vmem>>, %arg1: memref<1x32xf32, #tpu.memory_space<vmem>>, %arg2: memref<1x32xf32, #tpu.memory_space<vmem>>, %arg3: memref<32x16xbf16, #tpu.memory_space<vmem>>, %arg4: memref<1x16xf32, #tpu.memory_space<vmem>>, %arg5: memref<1x16xf32, #tpu.memory_space<vmem>>, %arg6: memref<1x16xf32, #tpu.memory_space<vmem>>, %arg7: memref<16x128xbf16, #tpu.memory_space<vmem>>, %arg8: memref<1x128xf32, #tpu.memory_space<vmem>>, %arg9: memref<2x128xf32, #tpu.memory_space<vmem>>) attributes {dimension_semantics = [], scalar_prefetch = 0 : i64, scratch_operands = 0 : i64, tpu.core_type = #tpu.core_type<tc>} {
    %c0 = arith.constant 0 : index
    %c0_0 = arith.constant 0 : index
    %0 = vector.load %arg0[%c0, %c0_0] : memref<2x32xf32, #tpu.memory_space<vmem>>, vector<2x32xf32>
    %c0_1 = arith.constant 0 : index
    %c0_2 = arith.constant 0 : index
    %1 = vector.load %arg1[%c0_1, %c0_2] : memref<1x32xf32, #tpu.memory_space<vmem>>, vector<1x32xf32>
    %c0_3 = arith.constant 0 : index
    %c0_4 = arith.constant 0 : index
    %2 = vector.load %arg2[%c0_3, %c0_4] : memref<1x32xf32, #tpu.memory_space<vmem>>, vector<1x32xf32>
    %cst = arith.constant dense<0.000000e+00> : vector<2xf32>
    %3 = vector.multi_reduction <add>, %0, %cst [1] : vector<2x32xf32> to vector<2xf32>
    %4 = vector.shape_cast %3 : vector<2xf32> to vector<2x1xf32>
    %cst_5 = arith.constant 3.200000e+01 : f32
    %5 = vector.broadcast %cst_5 : f32 to vector<2x1xf32>
    %6 = arith.divf %4, %5 : vector<2x1xf32>
    %7 = vector.broadcast %6 : vector<2x1xf32> to vector<2x32xf32>
    %8 = arith.subf %0, %7 : vector<2x32xf32>
    %9 = arith.mulf %8, %8 : vector<2x32xf32>
    %cst_6 = arith.constant dense<0.000000e+00> : vector<2xf32>
    %10 = vector.multi_reduction <add>, %9, %cst_6 [1] : vector<2x32xf32> to vector<2xf32>
    %11 = vector.shape_cast %10 : vector<2xf32> to vector<2x1xf32>
    %cst_7 = arith.constant 3.200000e+01 : f32
    %12 = vector.broadcast %cst_7 : f32 to vector<2x1xf32>
    %13 = arith.divf %11, %12 : vector<2x1xf32>
    %cst_8 = arith.constant 9.99999974E-6 : f32
    %14 = vector.broadcast %cst_8 : f32 to vector<2x1xf32>
    %15 = arith.addf %13, %14 : vector<2x1xf32>
    %16 = math.rsqrt %15 : vector<2x1xf32>
    %17 = vector.broadcast %16 : vector<2x1xf32> to vector<2x32xf32>
    %18 = arith.mulf %8, %17 : vector<2x32xf32>
    %19 = vector.broadcast %1 : vector<1x32xf32> to vector<2x32xf32>
    %20 = arith.mulf %18, %19 : vector<2x32xf32>
    %21 = vector.broadcast %2 : vector<1x32xf32> to vector<2x32xf32>
    %22 = arith.addf %20, %21 : vector<2x32xf32>
    %c0_9 = arith.constant 0 : index
    %c0_10 = arith.constant 0 : index
    %23 = vector.load %arg3[%c0_9, %c0_10] : memref<32x16xbf16, #tpu.memory_space<vmem>>, vector<32x16xbf16>
    %24 = arith.truncf %22 : vector<2x32xf32> to vector<2x32xbf16>
    %cst_11 = arith.constant dense<0.000000e+00> : vector<2x16xf32>
    %25 = tpu.matmul %24, %23, %cst_11 {dimension_numbers = #tpu.dot_dimension_numbers<[1], [0], [0], [1], [0, 0, 1, 1], [], []>} : vector<2x32xbf16>, vector<32x16xbf16>, vector<2x16xf32> -> vector<2x16xf32>
    %c0_12 = arith.constant 0 : index
    %c0_13 = arith.constant 0 : index
    %26 = vector.load %arg4[%c0_12, %c0_13] : memref<1x16xf32, #tpu.memory_space<vmem>>, vector<1x16xf32>
    %27 = vector.broadcast %26 : vector<1x16xf32> to vector<2x16xf32>
    %28 = arith.addf %25, %27 : vector<2x16xf32>
    %c0_14 = arith.constant 0 : index
    %c0_15 = arith.constant 0 : index
    %29 = vector.load %arg5[%c0_14, %c0_15] : memref<1x16xf32, #tpu.memory_space<vmem>>, vector<1x16xf32>
    %c0_16 = arith.constant 0 : index
    %c0_17 = arith.constant 0 : index
    %30 = vector.load %arg6[%c0_16, %c0_17] : memref<1x16xf32, #tpu.memory_space<vmem>>, vector<1x16xf32>
    %cst_18 = arith.constant dense<0.000000e+00> : vector<2xf32>
    %31 = vector.multi_reduction <add>, %28, %cst_18 [1] : vector<2x16xf32> to vector<2xf32>
    %32 = vector.shape_cast %31 : vector<2xf32> to vector<2x1xf32>
    %cst_19 = arith.constant 1.600000e+01 : f32
    %33 = vector.broadcast %cst_19 : f32 to vector<2x1xf32>
    %34 = arith.divf %32, %33 : vector<2x1xf32>
    %35 = vector.broadcast %34 : vector<2x1xf32> to vector<2x16xf32>
    %36 = arith.subf %28, %35 : vector<2x16xf32>
    %37 = arith.mulf %36, %36 : vector<2x16xf32>
    %cst_20 = arith.constant dense<0.000000e+00> : vector<2xf32>
    %38 = vector.multi_reduction <add>, %37, %cst_20 [1] : vector<2x16xf32> to vector<2xf32>
    %39 = vector.shape_cast %38 : vector<2xf32> to vector<2x1xf32>
    %cst_21 = arith.constant 1.600000e+01 : f32
    %40 = vector.broadcast %cst_21 : f32 to vector<2x1xf32>
    %41 = arith.divf %39, %40 : vector<2x1xf32>
    %cst_22 = arith.constant 9.99999974E-6 : f32
    %42 = vector.broadcast %cst_22 : f32 to vector<2x1xf32>
    %43 = arith.addf %41, %42 : vector<2x1xf32>
    %44 = math.rsqrt %43 : vector<2x1xf32>
    %45 = vector.broadcast %44 : vector<2x1xf32> to vector<2x16xf32>
    %46 = arith.mulf %36, %45 : vector<2x16xf32>
    %47 = vector.broadcast %29 : vector<1x16xf32> to vector<2x16xf32>
    %48 = arith.mulf %46, %47 : vector<2x16xf32>
    %49 = vector.broadcast %30 : vector<1x16xf32> to vector<2x16xf32>
    %50 = arith.addf %48, %49 : vector<2x16xf32>
    %cst_23 = arith.constant 0.000000e+00 : f32
    %51 = vector.broadcast %cst_23 : f32 to vector<2x16xf32>
    %52 = arith.maximumf %50, %51 : vector<2x16xf32>
    %c0_24 = arith.constant 0 : index
    %c0_25 = arith.constant 0 : index
    %53 = vector.load %arg7[%c0_24, %c0_25] : memref<16x128xbf16, #tpu.memory_space<vmem>>, vector<16x128xbf16>
    %54 = arith.truncf %52 : vector<2x16xf32> to vector<2x16xbf16>
    %cst_26 = arith.constant dense<0.000000e+00> : vector<2x128xf32>
    %55 = tpu.matmul %54, %53, %cst_26 {dimension_numbers = #tpu.dot_dimension_numbers<[1], [0], [0], [1], [0, 0, 1, 1], [], []>} : vector<2x16xbf16>, vector<16x128xbf16>, vector<2x128xf32> -> vector<2x128xf32>
    %c0_27 = arith.constant 0 : index
    %c0_28 = arith.constant 0 : index
    %56 = vector.load %arg8[%c0_27, %c0_28] : memref<1x128xf32, #tpu.memory_space<vmem>>, vector<1x128xf32>
    %57 = vector.broadcast %56 : vector<1x128xf32> to vector<2x128xf32>
    %58 = arith.addf %55, %57 : vector<2x128xf32>
    %c0_29 = arith.constant 0 : index
    %c0_30 = arith.constant 0 : index
    %59 = vector.load %arg9[%c0_29, %c0_30] : memref<2x128xf32, #tpu.memory_space<vmem>>, vector<2x128xf32>
    tpu.vector_store %arg9[%c0_29, %c0_30], %58 {strides = array<i32>} : memref<2x128xf32, #tpu.memory_space<vmem>>, vector<2x128xf32>,
    return
  }
}

</mosaic_0001>

<llo_original>
// kernel: _lambda_.3
$region0: #{_lambda_.3}
  #allocation0 [shape = 'u32[]', space=smem, size = 0x4, offset = 0x4, fixed_abs, tag = 'smem constant byte address 0x4 - core index']
  #allocation1 [shape = 'u32[72,128]{1,0:T(1,128)}', space=vmem, size = 0x9000, scoped, tag = 'internal scratch']
  %s0 = inlined_call_operand.vmem [shape: f32[2,4,256], index: 0, kind: input, shape index: {}]
  %s1 = inlined_call_operand.vmem [shape: bf16[256,32], index: 1, kind: input, shape index: {}]
  %s2 = inlined_call_operand.vmem [shape: f32[1,32], index: 2, kind: input, shape index: {}]
  %s3 = inlined_call_operand.vmem [shape: f32[4,32], index: 3, kind: input, shape index: {}]
  %s4 = inlined_call_operand.vmem [shape: f32[2,4,32], index: 4, kind: output, shape index: {}]
  %s5 = sld [smem:[#allocation0]]
  $region49: #{_lambda_.3} parent=0
    _
  %s7 = ssub.s32 1, %s5
  %s8 = scalar_select 0, %s7, %s5
  loop: start=0, step=1, limit=4
  $region2: #{_lambda_.3} parent=0 // loop_pre_header
    _
  $region3: #{_lambda_.3} parent=0 // loop_header
    %s10 = sphi 0, %s14
    %p11 = scmp.ge.s32.totalorder %s10, 4
    %s20 = sphi 0, %s22
    %s23 = sphi 0, %s20
    %s24 = sphi 0, %s23
    %s40 = sphi 0, %s24
    %s44 = sphi 0, %s44
    %s46 = sphi 0, %s44
    %s47 = sphi 0, %s46
    %s61 = sphi 0, %s47
    %s65 = sphi 0, %s65
    %s67 = sphi 0, %s65
    %s68 = sphi 0, %s67
    %s82 = sphi 0, %s68
    %s86 = sphi 0, %s86
    %s88 = sphi 0, %s86
    %s89 = sphi 0, %s88
    %s103 = sphi 0, %s89
    %s109 = sphi 0, %s111
    %s112 = sphi 0, %s109
    %s113 = sphi 0, %s112
    %s129 = sphi 0, %s113
  $region4: #{_lambda_.3} parent=0 // loop_header_branch
    %13 = sbr.rel (%p11) target = $region8
  $region5: #{_lambda_.3} parent=0 // loop_body
    %s15 = ssub.s32 %s10, 1
    %s16 = ssub.s32 %s10, 2
    %s17 = sadd.s32 %s10, 1
    %s18 = ssub.s32 %s10, %s17
    %p19 = scmp.eq.s32.totalorder %s18, 0
    %s21 = sadd.s32 %s20, 1
    %s22 = scalar_select %p19, %s20, %s21
    %p25 = pneg %p19
    %p26 = scmp.eq.s32.totalorder %s10, 1
    %p27 = por %p25, %p26
    %p28 = scmp.ne.s32.totalorder %s20, %s23
    %p29 = scmp.eq.s32.totalorder %s10, 0
    %p30 = por %p28, %p29
    %p31 = scmp.ne.s32.totalorder %s20, %s23
    %p32 = scmp.eq.s32.totalorder %s15, 1
    %p33 = por %p31, %p32
    %p34 = scmp.ne.s32.totalorder %s23, %s24
    %p35 = scmp.eq.s32.totalorder %s15, 0
    %p36 = por %p34, %p35
    %p37 = scmp.ne.s32.totalorder %s23, %s24
    %p38 = scmp.eq.s32.totalorder %s16, 1
    %p39 = por %p37, %p38
    %p41 = scmp.ne.s32.totalorder %s24, %s40
    %p42 = scmp.eq.s32.totalorder %s16, 0
    %p43 = por %p41, %p42
    %s45 = sadd.s32 %s44, 1
    %p48 = scmp.eq.s32.totalorder %s10, 1
    %p49 = scmp.ne.s32.totalorder %s44, %s46
    %p50 = scmp.eq.s32.totalorder %s10, 0
    %p51 = por %p49, %p50
    %p52 = scmp.ne.s32.totalorder %s44, %s46
    %p53 = scmp.eq.s32.totalorder %s15, 1
    %p54 = por %p52, %p53
    %p55 = scmp.ne.s32.totalorder %s46, %s47
    %p56 = scmp.eq.s32.totalorder %s15, 0
    %p57 = por %p55, %p56
    %p58 = scmp.ne.s32.totalorder %s46, %s47
    %p59 = scmp.eq.s32.totalorder %s16, 1
    %p60 = por %p58, %p59
    %p62 = scmp.ne.s32.totalorder %s47, %s61
    %p63 = scmp.eq.s32.totalorder %s16, 0
    %p64 = por %p62, %p63
    %s66 = sadd.s32 %s65, 1
    %p69 = scmp.eq.s32.totalorder %s10, 1
    %p70 = scmp.ne.s32.totalorder %s65, %s67
    %p71 = scmp.eq.s32.totalorder %s10, 0
    %p72 = por %p70, %p71
    %p73 = scmp.ne.s32.totalorder %s65, %s67
    %p74 = scmp.eq.s32.totalorder %s15, 1
    %p75 = por %p73, %p74
    %p76 = scmp.ne.s32.totalorder %s67, %s68
    %p77 = scmp.eq.s32.totalorder %s15, 0
    %p78 = por %p76, %p77
    %p79 = scmp.ne.s32.totalorder %s67, %s68
    %p80 = scmp.eq.s32.totalorder %s16, 1
    %p81 = por %p79, %p80
    %p83 = scmp.ne.s32.totalorder %s68, %s82
    %p84 = scmp.eq.s32.totalorder %s16, 0
    %p85 = por %p83, %p84
    %s87 = sadd.s32 %s86, 1
    %p90 = scmp.eq.s32.totalorder %s10, 1
    %p91 = scmp.ne.s32.totalorder %s86, %s88
    %p92 = scmp.eq.s32.totalorder %s10, 0
    %p93 = por %p91, %p92
    %p94 = scmp.ne.s32.totalorder %s86, %s88
    %p95 = scmp.eq.s32.totalorder %s15, 1
    %p96 = por %p94, %p95
    %p97 = scmp.ne.s32.totalorder %s88, %s89
    %p98 = scmp.eq.s32.totalorder %s15, 0
    %p99 = por %p97, %p98
    %p100 = scmp.ne.s32.totalorder %s88, %s89
    %p101 = scmp.eq.s32.totalorder %s16, 1
    %p102 = por %p100, %p101
    %p104 = scmp.ne.s32.totalorder %s89, %s103
    %p105 = scmp.eq.s32.totalorder %s16, 0
    %p106 = por %p104, %p105
    %s107 = ssub.s32 %s10, %s17
    %p108 = scmp.eq.s32.totalorder %s107, 0
    %s110 = sadd.s32 %s109, 1
    %s111 = scalar_select %p108, %s109, %s110
    %p114 = pneg %p108
    %p115 = scmp.eq.s32.totalorder %s10, 1
    %p116 = por %p114, %p115
    %p117 = scmp.ne.s32.totalorder %s109, %s112
    %p118 = scmp.eq.s32.totalorder %s10, 0
    %p119 = por %p117, %p118
    %p120 = scmp.ne.s32.totalorder %s109, %s112
    %p121 = scmp.eq.s32.totalorder %s15, 1
    %p122 = por %p120, %p121
    %p123 = scmp.ne.s32.totalorder %s112, %s113
    %p124 = scmp.eq.s32.totalorder %s15, 0
    %p125 = por %p123, %p124
    %p126 = scmp.ne.s32.totalorder %s112, %s113
    %p127 = scmp.eq.s32.totalorder %s16, 1
    %p128 = por %p126, %p127
    %p130 = scmp.ne.s32.totalorder %s113, %s129
    %p131 = scmp.eq.s32.totalorder %s16, 0
    %p132 = por %p130, %p131
    %p133 = scmp.le.s32.totalorder 1, %s10
    %p134 = scmp.lt.s32.totalorder %s10, 3
    %p135 = pnand %p133, %p134
    %p136 = pneg %p135
    // Predicated region
    $region9: #{_lambda_.3} parent=5 // pred_check
      _
    $region10: #{_lambda_.3} parent=5 // pred_check_branch
      %138 = sbr.rel (%p135) target = $region12
    $region11: #{_lambda_.3} parent=5 // pred_region
      %s139 = ssub.s32 %s10, 1
      // Predicated region
      $region13: #{_lambda_.3} parent=11 // pred_check
        %p140 = pneg %p57
      $region14: #{_lambda_.3} parent=11 // pred_check_branch
        %142 = sbr.rel (%p140) target = $region16
      $region15: #{_lambda_.3} parent=11 // pred_region
        _
      $region16: #{_lambda_.3} parent=11 // pred_fallthru
        _
      // Predicated region
      $region17: #{_lambda_.3} parent=11 // pred_check
        %p143 = pneg %p78
      $region18: #{_lambda_.3} parent=11 // pred_check_branch
        %145 = sbr.rel (%p143) target = $region20
      $region19: #{_lambda_.3} parent=11 // pred_region
        _
      $region20: #{_lambda_.3} parent=11 // pred_fallthru
        _
      // Predicated region
      $region21: #{_lambda_.3} parent=11 // pred_check
        %p146 = pneg %p99
      $region22: #{_lambda_.3} parent=11 // pred_check_branch
        %148 = sbr.rel (%p146) target = $region24
      $region23: #{_lambda_.3} parent=11 // pred_region
        _
      $region24: #{_lambda_.3} parent=11 // pred_fallthru
        _
    $region12: #{_lambda_.3} parent=5 // pred_fallthru
      _
    %p149 = scmp.lt.s32.totalorder %s10, 2
    // Predicated region
    $region25: #{_lambda_.3} parent=5 // pred_check
      %p150 = pneg %p149
    $region26: #{_lambda_.3} parent=5 // pred_check_branch
      %152 = sbr.rel (%p150) target = $region28
    $region27: #{_lambda_.3} parent=5 // pred_region
      // Predicated region
      $region29: #{_lambda_.3} parent=27 // pred_check
        %p153 = pneg %p30
      $region30: #{_lambda_.3} parent=27 // pred_check_branch
        %155 = sbr.rel (%p153) target = $region32
      $region31: #{_lambda_.3} parent=27 // pred_region
        %p156 = scmp.lt.s32.totalorder %s10, 1
        %s157 = scalar_select %p156, %s10, 1
        %s158 = smul.addr %s157, 2
        %s159 = smul.addr %s158, 4
        %s160 = scalar_lea.vmem %s0, %s159
      $region32: #{_lambda_.3} parent=27 // pred_fallthru
        _
    $region28: #{_lambda_.3} parent=5 // pred_fallthru
      _
    %p161 = scmp.le.s32.totalorder 1, %s10
    %p162 = scmp.lt.s32.totalorder %s10, 3
    %p163 = pnand %p161, %p162
    %p164 = pneg %p163
    // Predicated region
    $region33: #{_lambda_.3} parent=5 // pred_check
      _
    $region34: #{_lambda_.3} parent=5 // pred_check_branch
      %166 = sbr.rel (%p163) target = $region36
    $region35: #{_lambda_.3} parent=5 // pred_region
      %s167 = ssub.s32 %s10, 1
      %p168 = scmp.lt.s32.totalorder %s15, 1
      %s169 = scalar_select %p168, %s15, 1
      %s170 = smul.addr %s169, 2
      %s171 = smul.addr %s170, 4
      %s172 = scalar_lea.vmem %s0, %s171
      %p173 = pneg %p36
      %p174 = pneg %p33
      %p175 = pneg %p57
      %p176 = pneg %p54
      %p177 = pneg %p78
      %p178 = pneg %p75
      %p179 = pneg %p99
      %p180 = pneg %p96
      %p181 = pneg %p125
      %p182 = pneg %p122
      %p183 = scmp.lt.s32.totalorder %s15, 1
      %s184 = scalar_select %p183, %s15, 1
      %s185 = smul.addr %s184, 4
      %s186 = scalar_lea.vmem %s4, %s185
      %p187 = scmp.lt.s32.totalorder %s15, 1
      %s188 = scalar_select %p187, %s15, 1
      %s189 = smul.addr %s188, 2
      %s190 = smul.addr %s189, 4
      %s191 = scalar_lea.vmem %s0, %s190
      %p192 = scmp.lt.s32.totalorder %s15, 1
      %s193 = scalar_select %p192, %s15, 1
      %s194 = smul.addr %s193, 4
      %s195 = scalar_lea.vmem %s4, %s194
      %v196 = vld [vmem:[%s191] sm:$0xff]
      %v197 = vld [vmem:[%s1] sm:$0xf]
      %v198 = vld [vmem:[%s1 + $0x4] sm:$0xf]
      %v199 = vld [vmem:[%s1 + $0x8] sm:$0xf]
      %v200 = vld [vmem:[%s1 + $0xc] sm:$0xf]
      %v201 = vld [vmem:[%s1 + $0x10] sm:$0xf]
      %v202 = vld [vmem:[%s1 + $0x14] sm:$0xf]
      %v203 = vld [vmem:[%s1 + $0x18] sm:$0xf]
      %v204 = vld [vmem:[%s1 + $0x1c] sm:$0xf]
      %v205 = vld [vmem:[%s1 + $0x20] sm:$0xf]
      %v206 = vld [vmem:[%s1 + $0x24] sm:$0xf]
      %v207 = vld [vmem:[%s1 + $0x28] sm:$0xf]
      %v208 = vld [vmem:[%s1 + $0x2c] sm:$0xf]
      %v209 = vld [vmem:[%s1 + $0x30] sm:$0xf]
      %v210 = vld [vmem:[%s1 + $0x34] sm:$0xf]
      %v211 = vld [vmem:[%s1 + $0x38] sm:$0xf]
      %v212 = vld [vmem:[%s1 + $0x3c] sm:$0xf]
      %v213 = vld [vmem:[%s1 + $0x40] sm:$0xf]
      %v214 = vld [vmem:[%s1 + $0x44] sm:$0xf]
      %v215 = vld [vmem:[%s1 + $0x48] sm:$0xf]
      %v216 = vld [vmem:[%s1 + $0x4c] sm:$0xf]
      %v217 = vld [vmem:[%s1 + $0x50] sm:$0xf]
      %v218 = vld [vmem:[%s1 + $0x54] sm:$0xf]
      %v219 = vld [vmem:[%s1 + $0x58] sm:$0xf]
      %v220 = vld [vmem:[%s1 + $0x5c] sm:$0xf]
      %v221 = vld [vmem:[%s1 + $0x60] sm:$0xf]
      %v222 = vld [vmem:[%s1 + $0x64] sm:$0xf]
      %v223 = vld [vmem:[%s1 + $0x68] sm:$0xf]
      %v224 = vld [vmem:[%s1 + $0x6c] sm:$0xf]
      %v225 = vld [vmem:[%s1 + $0x70] sm:$0xf]
      %v226 = vld [vmem:[%s1 + $0x74] sm:$0xf]
      %v227 = vld [vmem:[%s1 + $0x78] sm:$0xf]
      %v228 = vld [vmem:[%s1 + $0x7c] sm:$0xf]
      %230 = vst [vmem:[#allocation1] ss:$2 sm:$0xff] %v196
      %v231 = vld.sshfl [vmem:[#allocation1] sm:$0xff pattern:$0x75316420]
      %v232 = vld.sshfl [vmem:[#allocation1 + $0x8] sm:$0xff pattern:$0x75316420]
      %v235 = vpack.c.bf16 %v231, %v231
      %v236 = vpack.c.bf16 %v232, %v232
      %v237 = vld [vmem:[%s2] sm:$0x1]
      %v239 = vperm.slane %v237, 0
      %v273 = vunpack.c.l.b16 %v197
      %v274 = vunpack.c.l.b16 %v198
      %v275 = vunpack.c.l.b16 %v199
      %v276 = vunpack.c.l.b16 %v200
      %v277 = vunpack.c.l.b16 %v201
      %v278 = vunpack.c.l.b16 %v202
      %v279 = vunpack.c.l.b16 %v203
      %v280 = vunpack.c.l.b16 %v204
      %v281 = vunpack.c.l.b16 %v205
      %v282 = vunpack.c.l.b16 %v206
      %v283 = vunpack.c.l.b16 %v207
      %v284 = vunpack.c.l.b16 %v208
      %v285 = vunpack.c.l.b16 %v209
      %v286 = vunpack.c.l.b16 %v210
      %v287 = vunpack.c.l.b16 %v211
      %v288 = vunpack.c.l.b16 %v212
      %v289 = vunpack.c.l.b16 %v213
      %v290 = vunpack.c.l.b16 %v214
      %v291 = vunpack.c.l.b16 %v215
      %v292 = vunpack.c.l.b16 %v216
      %v293 = vunpack.c.l.b16 %v217
      %v294 = vunpack.c.l.b16 %v218
      %v295 = vunpack.c.l.b16 %v219
      %v296 = vunpack.c.l.b16 %v220
      %v297 = vunpack.c.l.b16 %v221
      %v298 = vunpack.c.l.b16 %v222
      %v299 = vunpack.c.l.b16 %v223
      %v300 = vunpack.c.l.b16 %v224
      %v301 = vunpack.c.l.b16 %v225
      %v302 = vunpack.c.l.b16 %v226
      %v303 = vunpack.c.l.b16 %v227
      %v304 = vunpack.c.l.b16 %v228
      %v305 = vpack.c.b16 %v274, %v273
      %v306 = vpack.c.b16 %v276, %v275
      %v307 = vpack.c.b16 %v278, %v277
      %v308 = vpack.c.b16 %v280, %v279
      %v309 = vpack.c.b16 %v282, %v281
      %v310 = vpack.c.b16 %v284, %v283
      %v311 = vpack.c.b16 %v286, %v285
      %v312 = vpack.c.b16 %v288, %v287
      %v313 = vpack.c.b16 %v290, %v289
      %v314 = vpack.c.b16 %v292, %v291
      %v315 = vpack.c.b16 %v294, %v293
      %v316 = vpack.c.b16 %v296, %v295
      %v317 = vpack.c.b16 %v298, %v297
      %v318 = vpack.c.b16 %v300, %v299
      %v319 = vpack.c.b16 %v302, %v301
      %v320 = vpack.c.b16 %v304, %v303
      %337 = vmatpush.bf16.msra.mxu0 %v312
      %338 = vmatpush.bf16.msra.mxu0 %v311
      %339 = vmatpush.bf16.msra.mxu0 %v310
      %340 = vmatpush.bf16.msra.mxu0 %v309
      %341 = vmatpush.bf16.msra.mxu0 %v308
      %342 = vmatpush.bf16.msra.mxu0 %v307
      %343 = vmatpush.bf16.msra.mxu0 %v306
      %344 = vmatpush.bf16.msra.mxu0 %v305
      %345 = vmatmul.bf16.gmra.mxu0 %v235
      %v346 = vpop.f32.mrf.mxu0
      %v347 = vadd.f32 %v239, %v346
      %v348 = vpop.f32.mrf.mxu0
      %349 = vdwg.mxu0
      %350 = vmatpush.bf16.msra.mxu0 %v320
      %351 = vmatpush.bf16.msra.mxu0 %v319
      %352 = vmatpush.bf16.msra.mxu0 %v318
      %353 = vmatpush.bf16.msra.mxu0 %v317
      %354 = vmatpush.bf16.msra.mxu0 %v316
      %355 = vmatpush.bf16.msra.mxu0 %v315
      %356 = vmatpush.bf16.msra.mxu0 %v314
      %357 = vmatpush.bf16.msra.mxu0 %v313
      %358 = vmatmul.bf16.gmra.mxu0 %v236
      %v359 = vpop.f32.mrf.mxu0
      %v360 = vadd.f32 %v347, %v359
      %v361 = vpop.f32.mrf.mxu0
      %362 = vdwg.mxu0
      %v363 = vld [vmem:[%s3] sm:$0xf]
      %v364 = vadd.f32 %v360, %v363
      %vm365 = vcmask 257024
      %366 = vst.msk [vmem:[%s195] sm:$0xf] %vm365, %v364
      %p367 = scmp.lt.s32.totalorder %s15, 1
      %s368 = scalar_select %p367, %s15, 1
      %s369 = smul.addr %s368, 4
      %s370 = scalar_lea.vmem %s4, %s369
      // Predicated region
      $region37: #{_lambda_.3} parent=35 // pred_check
        %p371 = pneg %p122
      $region38: #{_lambda_.3} parent=35 // pred_check_branch
        %373 = sbr.rel (%p371) target = $region40
      $region39: #{_lambda_.3} parent=35 // pred_region
        _
      $region40: #{_lambda_.3} parent=35 // pred_fallthru
        _
    $region36: #{_lambda_.3} parent=5 // pred_fallthru
      _
    %p374 = scmp.le.s32.totalorder 2, %s10
    // Predicated region
    $region41: #{_lambda_.3} parent=5 // pred_check
      %p375 = pneg %p374
    $region42: #{_lambda_.3} parent=5 // pred_check_branch
      %377 = sbr.rel (%p375) target = $region44
    $region43: #{_lambda_.3} parent=5 // pred_region
      %s378 = ssub.s32 %s10, 2
      // Predicated region
      $region45: #{_lambda_.3} parent=43 // pred_check
        %p379 = pneg %p128
      $region46: #{_lambda_.3} parent=43 // pred_check_branch
        %381 = sbr.rel (%p379) target = $region48
      $region47: #{_lambda_.3} parent=43 // pred_region
        %p382 = scmp.lt.s32.totalorder %s16, 1
        %s383 = scalar_select %p382, %s16, 1
        %s384 = smul.addr %s383, 4
        %s385 = scalar_lea.vmem %s4, %s384
      $region48: #{_lambda_.3} parent=43 // pred_fallthru
        _
    $region44: #{_lambda_.3} parent=5 // pred_fallthru
      _
  $region6: #{_lambda_.3} parent=0 // loop_footer
    %s14 = sadd.s32 1, %s10
  $region7: #{_lambda_.3} parent=0 // loop_footer_branch
    %9 = sbr.rel target = $region3
  $region8: #{_lambda_.3} parent=0 // loop_exit
    _

// kernel: _lambda_.5
$region0: #{_lambda_.5}
  #allocation0 [shape = 'u32[]', space=smem, size = 0x4, offset = 0x4, fixed_abs, tag = 'smem constant byte address 0x4 - core index']
  #allocation1 [shape = 'u32[72,128]{1,0:T(1,128)}', space=vmem, size = 0x9000, scoped, tag = 'internal scratch']
  %s0 = inlined_call_operand.vmem [shape: f32[2,32], index: 0, kind: input, shape index: {}]
  %s1 = inlined_call_operand.vmem [shape: f32[1,32], index: 1, kind: input, shape index: {}]
  %s2 = inlined_call_operand.vmem [shape: f32[1,32], index: 2, kind: input, shape index: {}]
  %s3 = inlined_call_operand.vmem [shape: bf16[32,16], index: 3, kind: input, shape index: {}]
  %s4 = inlined_call_operand.vmem [shape: f32[1,16], index: 4, kind: input, shape index: {}]
  %s5 = inlined_call_operand.vmem [shape: f32[1,16], index: 5, kind: input, shape index: {}]
  %s6 = inlined_call_operand.vmem [shape: f32[1,16], index: 6, kind: input, shape index: {}]
  %s7 = inlined_call_operand.vmem [shape: bf16[16,128], index: 7, kind: input, shape index: {}]
  %s8 = inlined_call_operand.vmem [shape: f32[1,128], index: 8, kind: input, shape index: {}]
  %s9 = inlined_call_operand.vmem [shape: f32[2,128], index: 9, kind: output, shape index: {}]
  %s10 = sld [smem:[#allocation0]]
  $region46: #{_lambda_.5} parent=0
    _
  %s12 = ssub.s32 1, %s10
  %s13 = scalar_select 0, %s12, %s10
  // Predicated region
  $region2: #{_lambda_.5} parent=0 // pred_check
    _
  $region3: #{_lambda_.5} parent=0 // pred_check_branch
    %15 = sbr.rel (0) target = $region5
  $region4: #{_lambda_.5} parent=0 // pred_region
    _
  $region5: #{_lambda_.5} parent=0 // pred_fallthru
    _
  // Predicated region
  $region6: #{_lambda_.5} parent=0 // pred_check
    _
  $region7: #{_lambda_.5} parent=0 // pred_check_branch
    %17 = sbr.rel (0) target = $region9
  $region8: #{_lambda_.5} parent=0 // pred_region
    _
  $region9: #{_lambda_.5} parent=0 // pred_fallthru
    _
  // Predicated region
  $region10: #{_lambda_.5} parent=0 // pred_check
    _
  $region11: #{_lambda_.5} parent=0 // pred_check_branch
    %19 = sbr.rel (0) target = $region13
  $region12: #{_lambda_.5} parent=0 // pred_region
    _
  $region13: #{_lambda_.5} parent=0 // pred_fallthru
    _
  // Predicated region
  $region14: #{_lambda_.5} parent=0 // pred_check
    _
  $region15: #{_lambda_.5} parent=0 // pred_check_branch
    %21 = sbr.rel (0) target = $region17
  $region16: #{_lambda_.5} parent=0 // pred_region
    _
  $region17: #{_lambda_.5} parent=0 // pred_fallthru
    _
  // Predicated region
  $region18: #{_lambda_.5} parent=0 // pred_check
    _
  $region19: #{_lambda_.5} parent=0 // pred_check_branch
    %23 = sbr.rel (0) target = $region21
  $region20: #{_lambda_.5} parent=0 // pred_region
    _
  $region21: #{_lambda_.5} parent=0 // pred_fallthru
    _
  // Predicated region
  $region22: #{_lambda_.5} parent=0 // pred_check
    _
  $region23: #{_lambda_.5} parent=0 // pred_check_branch
    %25 = sbr.rel (0) target = $region25
  $region24: #{_lambda_.5} parent=0 // pred_region
    _
  $region25: #{_lambda_.5} parent=0 // pred_fallthru
    _
  // Predicated region
  $region26: #{_lambda_.5} parent=0 // pred_check
    _
  $region27: #{_lambda_.5} parent=0 // pred_check_branch
    %27 = sbr.rel (0) target = $region29
  $region28: #{_lambda_.5} parent=0 // pred_region
    _
  $region29: #{_lambda_.5} parent=0 // pred_fallthru
    _
  // Predicated region
  $region30: #{_lambda_.5} parent=0 // pred_check
    _
  $region31: #{_lambda_.5} parent=0 // pred_check_branch
    %29 = sbr.rel (0) target = $region33
  $region32: #{_lambda_.5} parent=0 // pred_region
    _
  $region33: #{_lambda_.5} parent=0 // pred_fallthru
    _
  // Predicated region
  $region34: #{_lambda_.5} parent=0 // pred_check
    _
  $region35: #{_lambda_.5} parent=0 // pred_check_branch
    %31 = sbr.rel (0) target = $region37
  $region36: #{_lambda_.5} parent=0 // pred_region
    _
  $region37: #{_lambda_.5} parent=0 // pred_fallthru
    _
  %v33 = vld [vmem:[%s0] sm:$0x3]
  %v34 = vld [vmem:[%s1] sm:$0x1]
  %v35 = vld [vmem:[%s2] sm:$0x1]
  %vm36 = vcmask 254976
  %v37 = vsel %vm36, %v33, 0.0
  %38 = vadd.xlane.f32.xlu0 %v37
  %v39 = vpop.xlane.xlu0 %38
  %v40 = vrcp.pop 32.0
  %v41 = vmul.f32 32.0, %v40
  %v42 = vsub.f32 1.0, %v41
  %v43 = vmul.f32 %v40, %v42
  %v44 = vadd.f32 %v40, %v43
  %vm45 = vweird.f32 %v40
  %v46 = vsel %vm45, %v40, %v44
  %v47 = vmul.f32 %v39, %v46
  %v48 = vsub.f32 %v33, %v47
  %v49 = vmul.f32 %v48, %v48
  %v50 = vsel %vm36, %v49, 0.0
  %51 = vadd.xlane.f32.xlu0 %v50
  %v52 = vpop.xlane.xlu0 %51
  %v53 = vmul.f32 %v52, %v46
  %v54 = vadd.f32 %v53, 1e-05
  %v55 = vrsqrt.pop %v54
  %v56 = vmul.f32 %v55, %v54
  %v57 = vmul.f32 %v56, %v55
  %v58 = vmul.f32 0.5, %v57
  %v59 = vsub.f32 1.5, %v58
  %v60 = vmul.f32 %v55, %v59
  %vm61 = vweird.f32 %v54
  %vm62 = vweird.f32 %v55
  %vm63 = vmor %vm61, %vm62
  %v64 = vsel %vm63, %v55, %v60
  %v65 = vmul.f32 %v48, %v64
  %v67 = vperm.slane %v34, 0
  %v69 = vmul.f32 %v65, %v67
  %v71 = vperm.slane %v35, 0
  %v73 = vadd.f32 %v69, %v71
  %v74 = vld [vmem:[%s3] sm:$0xf]
  %v75 = vld [vmem:[%s3 + $0x4] sm:$0xf]
  %v76 = vld [vmem:[%s3 + $0x8] sm:$0xf]
  %v77 = vld [vmem:[%s3 + $0xc] sm:$0xf]
  %v78 = vpack.c.bf16 %v73, %v73
  %v79 = vld [vmem:[%s4] sm:$0x1]
  %v81 = vperm.slane %v79, 0
  %v87 = vunpack.c.l.b16 %v74
  %v88 = vunpack.c.l.b16 %v75
  %v89 = vunpack.c.l.b16 %v76
  %v90 = vunpack.c.l.b16 %v77
  %v91 = vpack.c.b16 %v88, %v87
  %v92 = vpack.c.b16 %v90, %v89
  %vm95 = vcmask 261120
  %v97 = vsel %vm95, %v78, 0
  %99 = vmatpush.bf16.msra.mxu0 0
  %100 = vmatpush.bf16.msra.mxu0 0
  %101 = vmatpush.bf16.msra.mxu0 0
  %102 = vmatpush.bf16.msra.mxu0 0
  %103 = vmatpush.bf16.msra.mxu0 0
  %104 = vmatpush.bf16.msra.mxu0 0
  %105 = vmatpush.bf16.msra.mxu0 %v92
  %106 = vmatpush.bf16.msra.mxu0 %v91
  %107 = vmatmul.bf16.gmra.mxu0 %v97
  %v108 = vpop.f32.mrf.mxu0
  %v109 = vadd.f32 %v81, %v108
  %v110 = vpop.f32.mrf.mxu0
  %111 = vdwg.mxu0
  %v112 = vld [vmem:[%s5] sm:$0x1]
  %v113 = vld [vmem:[%s6] sm:$0x1]
  %vm114 = vcmask 123904
  %v115 = vsel %vm114, %v109, 0.0
  %116 = vadd.xlane.f32.xlu0 %v115
  %v117 = vpop.xlane.xlu0 %116
  %v118 = vrcp.pop 16.0
  %v119 = vmul.f32 16.0, %v118
  %v120 = vsub.f32 1.0, %v119
  %v121 = vmul.f32 %v118, %v120
  %v122 = vadd.f32 %v118, %v121
  %vm123 = vweird.f32 %v118
  %v124 = vsel %vm123, %v118, %v122
  %v125 = vmul.f32 %v117, %v124
  %v126 = vsub.f32 %v109, %v125
  %v127 = vmul.f32 %v126, %v126
  %v128 = vsel %vm114, %v127, 0.0
  %129 = vadd.xlane.f32.xlu0 %v128
  %v130 = vpop.xlane.xlu0 %129
  %v131 = vmul.f32 %v130, %v124
  %v132 = vadd.f32 %v131, 1e-05
  %v133 = vrsqrt.pop %v132
  %v134 = vmul.f32 %v133, %v132
  %v135 = vmul.f32 %v134, %v133
  %v136 = vmul.f32 0.5, %v135
  %v137 = vsub.f32 1.5, %v136
  %v138 = vmul.f32 %v133, %v137
  %vm139 = vweird.f32 %v132
  %vm140 = vweird.f32 %v133
  %vm141 = vmor %vm139, %vm140
  %v142 = vsel %vm141, %v133, %v138
  %v143 = vmul.f32 %v126, %v142
  %v145 = vperm.slane %v112, 0
  %v147 = vmul.f32 %v143, %v145
  %v149 = vperm.slane %v113, 0
  %v151 = vadd.f32 %v147, %v149
  %v152 = vmax.f32 %v151, 0.0
  %v153 = vld [vmem:[%s7] sm:$0xf]
  %v154 = vld [vmem:[%s7 + $0x4] sm:$0xf]
  %v155 = vpack.c.bf16 %v152, %v152
  %v156 = vld [vmem:[%s8] sm:$0x1]
  %v158 = vperm.slane %v156, 0
  %v162 = vunpack.c.l.b16 %v153
  %v163 = vunpack.c.l.b16 %v154
  %v164 = vpack.c.b16 %v163, %v162
  %vm166 = vcmask 130048
  %v168 = vsel %vm166, %v155, 0
  %170 = vmatpush.bf16.msra.mxu0 0
  %171 = vmatpush.bf16.msra.mxu0 0
  %172 = vmatpush.bf16.msra.mxu0 0
  %173 = vmatpush.bf16.msra.mxu0 0
  %174 = vmatpush.bf16.msra.mxu0 0
  %175 = vmatpush.bf16.msra.mxu0 0
  %176 = vmatpush.bf16.msra.mxu0 0
  %177 = vmatpush.bf16.msra.mxu0 %v164
  %178 = vmatmul.bf16.gmra.mxu0 %v168
  %v179 = vpop.f32.mrf.mxu0
  %v180 = vadd.f32 %v158, %v179
  %v181 = vpop.f32.mrf.mxu0
  %182 = vdwg.mxu0
  %183 = vst [vmem:[%s9] sm:$0x3] %v180
  // Predicated region
  $region38: #{_lambda_.5} parent=0 // pred_check
    _
  $region39: #{_lambda_.5} parent=0 // pred_check_branch
    %185 = sbr.rel (0) target = $region41
  $region40: #{_lambda_.5} parent=0 // pred_region
    _
  $region41: #{_lambda_.5} parent=0 // pred_fallthru
    _
  // Predicated region
  $region42: #{_lambda_.5} parent=0 // pred_check
    _
  $region43: #{_lambda_.5} parent=0 // pred_check_branch
    %187 = sbr.rel (0) target = $region45
  $region44: #{_lambda_.5} parent=0 // pred_region
    _
  $region45: #{_lambda_.5} parent=0 // pred_fallthru
    _

// kernel: _lambda_.4
$region0: #{_lambda_.4}
  #allocation0 [shape = 'u32[]', space=smem, size = 0x4, offset = 0x4, fixed_abs, tag = 'smem constant byte address 0x4 - core index']
  #allocation1 [shape = 'u32[72,128]{1,0:T(1,128)}', space=vmem, size = 0x9000, scoped, tag = 'internal scratch']
  #allocation2 [shape = 'f32[5,32]{1,0:T(8,128)}', space=vmem, size = 0x1000, scoped, tag = 'scratch operand']
  #allocation3 [shape = 'bf16[5,32]{1,0:T(8,128)(2,1)}', space=vmem, size = 0x800, scoped, tag = 'scratch operand']
  %s0 = inlined_call_operand.vmem [shape: f32[2,5,32], index: 0, kind: input, shape index: {}]
  %s1 = inlined_call_operand.vmem [shape: f32[2,1,32], index: 1, kind: input, shape index: {}]
  %s2 = inlined_call_operand.vmem [shape: f32[2,1,32], index: 2, kind: input, shape index: {}]
  %s3 = inlined_call_operand.vmem [shape: bf16[2,32,96], index: 3, kind: input, shape index: {}]
  %s4 = inlined_call_operand.vmem [shape: f32[2,1,96], index: 4, kind: input, shape index: {}]
  %s5 = inlined_call_operand.vmem [shape: bf16[2,32,32], index: 5, kind: input, shape index: {}]
  %s6 = inlined_call_operand.vmem [shape: f32[2,1,32], index: 6, kind: input, shape index: {}]
  %s7 = inlined_call_operand.vmem [shape: f32[2,1,32], index: 7, kind: input, shape index: {}]
  %s8 = inlined_call_operand.vmem [shape: f32[2,1,32], index: 8, kind: input, shape index: {}]
  %s9 = inlined_call_operand.vmem [shape: bf16[2,32,128], index: 9, kind: input, shape index: {}]
  %s10 = inlined_call_operand.vmem [shape: f32[2,1,128], index: 10, kind: input, shape index: {}]
  %s11 = inlined_call_operand.vmem [shape: bf16[2,128,32], index: 11, kind: input, shape index: {}]
  %s12 = inlined_call_operand.vmem [shape: f32[2,1,32], index: 12, kind: input, shape index: {}]
  %s13 = inlined_call_operand.vmem [shape: f32[2,5,32], index: 13, kind: output, shape index: {}]
  %s14 = sld [smem:[#allocation0]]
  $region93: #{_lambda_.4} parent=0
    _
  %s16 = ssub.s32 1, %s14
  %s17 = scalar_select 0, %s16, %s14
  loop: start=0, step=1, limit=6
  $region2: #{_lambda_.4} parent=0 // loop_pre_header
    _
  $region3: #{_lambda_.4} parent=0 // loop_header
    %s19 = sphi 0, %s23
    %p20 = scmp.ge.s32.totalorder %s19, 6
    %s26 = sphi 0, %s38
    %s27 = sphi 0, %s34
    %s28 = sphi 0, %s26
    %s29 = sphi 0, %s27
    %s30 = sphi 0, %s28
    %s31 = sphi 0, %s29
    %s41 = sphi 0, %s43
    %s44 = sphi 0, %s41
    %s45 = sphi 0, %s44
    %s61 = sphi 0, %s45
    %s67 = sphi 0, %s69
    %s70 = sphi 0, %s67
    %s71 = sphi 0, %s70
    %s87 = sphi 0, %s71
    %s93 = sphi 0, %s95
    %s96 = sphi 0, %s93
    %s97 = sphi 0, %s96
    %s113 = sphi 0, %s97
    %s119 = sphi 0, %s121
    %s122 = sphi 0, %s119
    %s123 = sphi 0, %s122
    %s139 = sphi 0, %s123
    %s145 = sphi 0, %s147
    %s148 = sphi 0, %s145
    %s149 = sphi 0, %s148
    %s165 = sphi 0, %s149
    %s171 = sphi 0, %s173
    %s174 = sphi 0, %s171
    %s175 = sphi 0, %s174
    %s191 = sphi 0, %s175
    %s197 = sphi 0, %s199
    %s200 = sphi 0, %s197
    %s201 = sphi 0, %s200
    %s217 = sphi 0, %s201
    %s223 = sphi 0, %s225
    %s226 = sphi 0, %s223
    %s227 = sphi 0, %s226
    %s243 = sphi 0, %s227
    %s249 = sphi 0, %s251
    %s252 = sphi 0, %s249
    %s253 = sphi 0, %s252
    %s269 = sphi 0, %s253
    %s275 = sphi 0, %s277
    %s278 = sphi 0, %s275
    %s279 = sphi 0, %s278
    %s295 = sphi 0, %s279
    %s301 = sphi 0, %s303
    %s304 = sphi 0, %s301
    %s305 = sphi 0, %s304
    %s321 = sphi 0, %s305
    %s327 = sphi 0, %s329
    %s330 = sphi 0, %s327
    %s331 = sphi 0, %s330
    %s347 = sphi 0, %s331
    %s353 = sphi 0, %s355
    %s356 = sphi 0, %s353
    %s357 = sphi 0, %s356
    %s373 = sphi 0, %s357
    %s379 = sphi 0, %s381
    %s382 = sphi 0, %s379
    %s383 = sphi 0, %s382
    %s399 = sphi 0, %s383
  $region4: #{_lambda_.4} parent=0 // loop_header_branch
    %22 = sbr.rel (%p20) target = $region8
  $region5: #{_lambda_.4} parent=0 // loop_body
    %s24 = ssub.s32 %s19, 1
    %s25 = ssub.s32 %s19, 2
    %s32 = sadd.s32 1, %s27
    %p33 = scmp.ge.s32.totalorder %s32, 2
    %s34 = scalar_select %p33, 0, %s32
    %s35 = sadd.s32 1, %s26
    %s36 = scalar_select %p33, %s35, %s26
    %p37 = scmp.ge.s32.totalorder %s36, 2
    %s38 = scalar_select %p37, 0, %s36
    %s39 = ssub.s32 %s26, %s38
    %p40 = scmp.eq.s32.totalorder %s39, 0
    %s42 = sadd.s32 %s41, 1
    %s43 = scalar_select %p40, %s41, %s42
    %p46 = pneg %p40
    %p47 = scmp.eq.s32.totalorder %s19, 3
    %p48 = por %p46, %p47
    %p49 = scmp.ne.s32.totalorder %s41, %s44
    %p50 = scmp.eq.s32.totalorder %s19, 0
    %p51 = por %p49, %p50
    %p52 = scmp.ne.s32.totalorder %s41, %s44
    %p53 = scmp.eq.s32.totalorder %s24, 3
    %p54 = por %p52, %p53
    %p55 = scmp.ne.s32.totalorder %s44, %s45
    %p56 = scmp.eq.s32.totalorder %s24, 0
    %p57 = por %p55, %p56
    %p58 = scmp.ne.s32.totalorder %s44, %s45
    %p59 = scmp.eq.s32.totalorder %s25, 3
    %p60 = por %p58, %p59
    %p62 = scmp.ne.s32.totalorder %s45, %s61
    %p63 = scmp.eq.s32.totalorder %s25, 0
    %p64 = por %p62, %p63
    %s65 = ssub.s32 %s27, %s34
    %p66 = scmp.eq.s32.totalorder %s65, 0
    %s68 = sadd.s32 %s67, 1
    %s69 = scalar_select %p66, %s67, %s68
    %p72 = pneg %p66
    %p73 = scmp.eq.s32.totalorder %s19, 3
    %p74 = por %p72, %p73
    %p75 = scmp.ne.s32.totalorder %s67, %s70
    %p76 = scmp.eq.s32.totalorder %s19, 0
    %p77 = por %p75, %p76
    %p78 = scmp.ne.s32.totalorder %s67, %s70
    %p79 = scmp.eq.s32.totalorder %s24, 3
    %p80 = por %p78, %p79
    %p81 = scmp.ne.s32.totalorder %s70, %s71
    %p82 = scmp.eq.s32.totalorder %s24, 0
    %p83 = por %p81, %p82
    %p84 = scmp.ne.s32.totalorder %s70, %s71
    %p85 = scmp.eq.s32.totalorder %s25, 3
    %p86 = por %p84, %p85
    %p88 = scmp.ne.s32.totalorder %s71, %s87
    %p89 = scmp.eq.s32.totalorder %s25, 0
    %p90 = por %p88, %p89
    %s91 = ssub.s32 %s27, %s34
    %p92 = scmp.eq.s32.totalorder %s91, 0
    %s94 = sadd.s32 %s93, 1
    %s95 = scalar_select %p92, %s93, %s94
    %p98 = pneg %p92
    %p99 = scmp.eq.s32.totalorder %s19, 3
    %p100 = por %p98, %p99
    %p101 = scmp.ne.s32.totalorder %s93, %s96
    %p102 = scmp.eq.s32.totalorder %s19, 0
    %p103 = por %p101, %p102
    %p104 = scmp.ne.s32.totalorder %s93, %s96
    %p105 = scmp.eq.s32.totalorder %s24, 3
    %p106 = por %p104, %p105
    %p107 = scmp.ne.s32.totalorder %s96, %s97
    %p108 = scmp.eq.s32.totalorder %s24, 0
    %p109 = por %p107, %p108
    %p110 = scmp.ne.s32.totalorder %s96, %s97
    %p111 = scmp.eq.s32.totalorder %s25, 3
    %p112 = por %p110, %p111
    %p114 = scmp.ne.s32.totalorder %s97, %s113
    %p115 = scmp.eq.s32.totalorder %s25, 0
    %p116 = por %p114, %p115
    %s117 = ssub.s32 %s27, %s34
    %p118 = scmp.eq.s32.totalorder %s117, 0
    %s120 = sadd.s32 %s119, 1
    %s121 = scalar_select %p118, %s119, %s120
    %p124 = pneg %p118
    %p125 = scmp.eq.s32.totalorder %s19, 3
    %p126 = por %p124, %p125
    %p127 = scmp.ne.s32.totalorder %s119, %s122
    %p128 = scmp.eq.s32.totalorder %s19, 0
    %p129 = por %p127, %p128
    %p130 = scmp.ne.s32.totalorder %s119, %s122
    %p131 = scmp.eq.s32.totalorder %s24, 3
    %p132 = por %p130, %p131
    %p133 = scmp.ne.s32.totalorder %s122, %s123
    %p134 = scmp.eq.s32.totalorder %s24, 0
    %p135 = por %p133, %p134
    %p136 = scmp.ne.s32.totalorder %s122, %s123
    %p137 = scmp.eq.s32.totalorder %s25, 3
    %p138 = por %p136, %p137
    %p140 = scmp.ne.s32.totalorder %s123, %s139
    %p141 = scmp.eq.s32.totalorder %s25, 0
    %p142 = por %p140, %p141
    %s143 = ssub.s32 %s27, %s34
    %p144 = scmp.eq.s32.totalorder %s143, 0
    %s146 = sadd.s32 %s145, 1
    %s147 = scalar_select %p144, %s145, %s146
    %p150 = pneg %p144
    %p151 = scmp.eq.s32.totalorder %s19, 3
    %p152 = por %p150, %p151
    %p153 = scmp.ne.s32.totalorder %s145, %s148
    %p154 = scmp.eq.s32.totalorder %s19, 0
    %p155 = por %p153, %p154
    %p156 = scmp.ne.s32.totalorder %s145, %s148
    %p157 = scmp.eq.s32.totalorder %s24, 3
    %p158 = por %p156, %p157
    %p159 = scmp.ne.s32.totalorder %s148, %s149
    %p160 = scmp.eq.s32.totalorder %s24, 0
    %p161 = por %p159, %p160
    %p162 = scmp.ne.s32.totalorder %s148, %s149
    %p163 = scmp.eq.s32.totalorder %s25, 3
    %p164 = por %p162, %p163
    %p166 = scmp.ne.s32.totalorder %s149, %s165
    %p167 = scmp.eq.s32.totalorder %s25, 0
    %p168 = por %p166, %p167
    %s169 = ssub.s32 %s27, %s34
    %p170 = scmp.eq.s32.totalorder %s169, 0
    %s172 = sadd.s32 %s171, 1
    %s173 = scalar_select %p170, %s171, %s172
    %p176 = pneg %p170
    %p177 = scmp.eq.s32.totalorder %s19, 3
    %p178 = por %p176, %p177
    %p179 = scmp.ne.s32.totalorder %s171, %s174
    %p180 = scmp.eq.s32.totalorder %s19, 0
    %p181 = por %p179, %p180
    %p182 = scmp.ne.s32.totalorder %s171, %s174
    %p183 = scmp.eq.s32.totalorder %s24, 3
    %p184 = por %p182, %p183
    %p185 = scmp.ne.s32.totalorder %s174, %s175
    %p186 = scmp.eq.s32.totalorder %s24, 0
    %p187 = por %p185, %p186
    %p188 = scmp.ne.s32.totalorder %s174, %s175
    %p189 = scmp.eq.s32.totalorder %s25, 3
    %p190 = por %p188, %p189
    %p192 = scmp.ne.s32.totalorder %s175, %s191
    %p193 = scmp.eq.s32.totalorder %s25, 0
    %p194 = por %p192, %p193
    %s195 = ssub.s32 %s27, %s34
    %p196 = scmp.eq.s32.totalorder %s195, 0
    %s198 = sadd.s32 %s197, 1
    %s199 = scalar_select %p196, %s197, %s198
    %p202 = pneg %p196
    %p203 = scmp.eq.s32.totalorder %s19, 3
    %p204 = por %p202, %p203
    %p205 = scmp.ne.s32.totalorder %s197, %s200
    %p206 = scmp.eq.s32.totalorder %s19, 0
    %p207 = por %p205, %p206
    %p208 = scmp.ne.s32.totalorder %s197, %s200
    %p209 = scmp.eq.s32.totalorder %s24, 3
    %p210 = por %p208, %p209
    %p211 = scmp.ne.s32.totalorder %s200, %s201
    %p212 = scmp.eq.s32.totalorder %s24, 0
    %p213 = por %p211, %p212
    %p214 = scmp.ne.s32.totalorder %s200, %s201
    %p215 = scmp.eq.s32.totalorder %s25, 3
    %p216 = por %p214, %p215
    %p218 = scmp.ne.s32.totalorder %s201, %s217
    %p219 = scmp.eq.s32.totalorder %s25, 0
    %p220 = por %p218, %p219
    %s221 = ssub.s32 %s27, %s34
    %p222 = scmp.eq.s32.totalorder %s221, 0
    %s224 = sadd.s32 %s223, 1
    %s225 = scalar_select %p222, %s223, %s224
    %p228 = pneg %p222
    %p229 = scmp.eq.s32.totalorder %s19, 3
    %p230 = por %p228, %p229
    %p231 = scmp.ne.s32.totalorder %s223, %s226
    %p232 = scmp.eq.s32.totalorder %s19, 0
    %p233 = por %p231, %p232
    %p234 = scmp.ne.s32.totalorder %s223, %s226
    %p235 = scmp.eq.s32.totalorder %s24, 3
    %p236 = por %p234, %p235
    %p237 = scmp.ne.s32.totalorder %s226, %s227
    %p238 = scmp.eq.s32.totalorder %s24, 0
    %p239 = por %p237, %p238
    %p240 = scmp.ne.s32.totalorder %s226, %s227
    %p241 = scmp.eq.s32.totalorder %s25, 3
    %p242 = por %p240, %p241
    %p244 = scmp.ne.s32.totalorder %s227, %s243
    %p245 = scmp.eq.s32.totalorder %s25, 0
    %p246 = por %p244, %p245
    %s247 = ssub.s32 %s27, %s34
    %p248 = scmp.eq.s32.totalorder %s247, 0
    %s250 = sadd.s32 %s249, 1
    %s251 = scalar_select %p248, %s249, %s250
    %p254 = pneg %p248
    %p255 = scmp.eq.s32.totalorder %s19, 3
    %p256 = por %p254, %p255
    %p257 = scmp.ne.s32.totalorder %s249, %s252
    %p258 = scmp.eq.s32.totalorder %s19, 0
    %p259 = por %p257, %p258
    %p260 = scmp.ne.s32.totalorder %s249, %s252
    %p261 = scmp.eq.s32.totalorder %s24, 3
    %p262 = por %p260, %p261
    %p263 = scmp.ne.s32.totalorder %s252, %s253
    %p264 = scmp.eq.s32.totalorder %s24, 0
    %p265 = por %p263, %p264
    %p266 = scmp.ne.s32.totalorder %s252, %s253
    %p267 = scmp.eq.s32.totalorder %s25, 3
    %p268 = por %p266, %p267
    %p270 = scmp.ne.s32.totalorder %s253, %s269
    %p271 = scmp.eq.s32.totalorder %s25, 0
    %p272 = por %p270, %p271
    %s273 = ssub.s32 %s27, %s34
    %p274 = scmp.eq.s32.totalorder %s273, 0
    %s276 = sadd.s32 %s275, 1
    %s277 = scalar_select %p274, %s275, %s276
    %p280 = pneg %p274
    %p281 = scmp.eq.s32.totalorder %s19, 3
    %p282 = por %p280, %p281
    %p283 = scmp.ne.s32.totalorder %s275, %s278
    %p284 = scmp.eq.s32.totalorder %s19, 0
    %p285 = por %p283, %p284
    %p286 = scmp.ne.s32.totalorder %s275, %s278
    %p287 = scmp.eq.s32.totalorder %s24, 3
    %p288 = por %p286, %p287
    %p289 = scmp.ne.s32.totalorder %s278, %s279
    %p290 = scmp.eq.s32.totalorder %s24, 0
    %p291 = por %p289, %p290
    %p292 = scmp.ne.s32.totalorder %s278, %s279
    %p293 = scmp.eq.s32.totalorder %s25, 3
    %p294 = por %p292, %p293
    %p296 = scmp.ne.s32.totalorder %s279, %s295
    %p297 = scmp.eq.s32.totalorder %s25, 0
    %p298 = por %p296, %p297
    %s299 = ssub.s32 %s27, %s34
    %p300 = scmp.eq.s32.totalorder %s299, 0
    %s302 = sadd.s32 %s301, 1
    %s303 = scalar_select %p300, %s301, %s302
    %p306 = pneg %p300
    %p307 = scmp.eq.s32.totalorder %s19, 3
    %p308 = por %p306, %p307
    %p309 = scmp.ne.s32.totalorder %s301, %s304
    %p310 = scmp.eq.s32.totalorder %s19, 0
    %p311 = por %p309, %p310
    %p312 = scmp.ne.s32.totalorder %s301, %s304
    %p313 = scmp.eq.s32.totalorder %s24, 3
    %p314 = por %p312, %p313
    %p315 = scmp.ne.s32.totalorder %s304, %s305
    %p316 = scmp.eq.s32.totalorder %s24, 0
    %p317 = por %p315, %p316
    %p318 = scmp.ne.s32.totalorder %s304, %s305
    %p319 = scmp.eq.s32.totalorder %s25, 3
    %p320 = por %p318, %p319
    %p322 = scmp.ne.s32.totalorder %s305, %s321
    %p323 = scmp.eq.s32.totalorder %s25, 0
    %p324 = por %p322, %p323
    %s325 = ssub.s32 %s27, %s34
    %p326 = scmp.eq.s32.totalorder %s325, 0
    %s328 = sadd.s32 %s327, 1
    %s329 = scalar_select %p326, %s327, %s328
    %p332 = pneg %p326
    %p333 = scmp.eq.s32.totalorder %s19, 3
    %p334 = por %p332, %p333
    %p335 = scmp.ne.s32.totalorder %s327, %s330
    %p336 = scmp.eq.s32.totalorder %s19, 0
    %p337 = por %p335, %p336
    %p338 = scmp.ne.s32.totalorder %s327, %s330
    %p339 = scmp.eq.s32.totalorder %s24, 3
    %p340 = por %p338, %p339
    %p341 = scmp.ne.s32.totalorder %s330, %s331
    %p342 = scmp.eq.s32.totalorder %s24, 0
    %p343 = por %p341, %p342
    %p344 = scmp.ne.s32.totalorder %s330, %s331
    %p345 = scmp.eq.s32.totalorder %s25, 3
    %p346 = por %p344, %p345
    %p348 = scmp.ne.s32.totalorder %s331, %s347
    %p349 = scmp.eq.s32.totalorder %s25, 0
    %p350 = por %p348, %p349
    %s351 = ssub.s32 %s27, %s34
    %p352 = scmp.eq.s32.totalorder %s351, 0
    %s354 = sadd.s32 %s353, 1
    %s355 = scalar_select %p352, %s353, %s354
    %p358 = pneg %p352
    %p359 = scmp.eq.s32.totalorder %s19, 3
    %p360 = por %p358, %p359
    %p361 = scmp.ne.s32.totalorder %s353, %s356
    %p362 = scmp.eq.s32.totalorder %s19, 0
    %p363 = por %p361, %p362
    %p364 = scmp.ne.s32.totalorder %s353, %s356
    %p365 = scmp.eq.s32.totalorder %s24, 3
    %p366 = por %p364, %p365
    %p367 = scmp.ne.s32.totalorder %s356, %s357
    %p368 = scmp.eq.s32.totalorder %s24, 0
    %p369 = por %p367, %p368
    %p370 = scmp.ne.s32.totalorder %s356, %s357
    %p371 = scmp.eq.s32.totalorder %s25, 3
    %p372 = por %p370, %p371
    %p374 = scmp.ne.s32.totalorder %s357, %s373
    %p375 = scmp.eq.s32.totalorder %s25, 0
    %p376 = por %p374, %p375
    %s377 = ssub.s32 %s26, %s38
    %p378 = scmp.eq.s32.totalorder %s377, 0
    %s380 = sadd.s32 %s379, 1
    %s381 = scalar_select %p378, %s379, %s380
    %p384 = pneg %p378
    %p385 = scmp.eq.s32.totalorder %s19, 3
    %p386 = por %p384, %p385
    %p387 = scmp.ne.s32.totalorder %s379, %s382
    %p388 = scmp.eq.s32.totalorder %s19, 0
    %p389 = por %p387, %p388
    %p390 = scmp.ne.s32.totalorder %s379, %s382
    %p391 = scmp.eq.s32.totalorder %s24, 3
    %p392 = por %p390, %p391
    %p393 = scmp.ne.s32.totalorder %s382, %s383
    %p394 = scmp.eq.s32.totalorder %s24, 0
    %p395 = por %p393, %p394
    %p396 = scmp.ne.s32.totalorder %s382, %s383
    %p397 = scmp.eq.s32.totalorder %s25, 3
    %p398 = por %p396, %p397
    %p400 = scmp.ne.s32.totalorder %s383, %s399
    %p401 = scmp.eq.s32.totalorder %s25, 0
    %p402 = por %p400, %p401
    %p403 = scmp.le.s32.totalorder 1, %s19
    %p404 = scmp.lt.s32.totalorder %s19, 5
    %p405 = pnand %p403, %p404
    %p406 = pneg %p405
    // Predicated region
    $region9: #{_lambda_.4} parent=5 // pred_check
      _
    $region10: #{_lambda_.4} parent=5 // pred_check_branch
      %408 = sbr.rel (%p405) target = $region12
    $region11: #{_lambda_.4} parent=5 // pred_region
      %s409 = ssub.s32 %s19, 1
    $region12: #{_lambda_.4} parent=5 // pred_fallthru
      _
    %p410 = scmp.lt.s32.totalorder %s19, 4
    // Predicated region
    $region13: #{_lambda_.4} parent=5 // pred_check
      %p411 = pneg %p410
    $region14: #{_lambda_.4} parent=5 // pred_check_branch
      %413 = sbr.rel (%p411) target = $region16
    $region15: #{_lambda_.4} parent=5 // pred_region
      // Predicated region
      $region17: #{_lambda_.4} parent=15 // pred_check
        %p414 = pneg %p51
      $region18: #{_lambda_.4} parent=15 // pred_check_branch
        %416 = sbr.rel (%p414) target = $region20
      $region19: #{_lambda_.4} parent=15 // pred_region
        %p417 = scmp.lt.s32.totalorder %s26, 1
        %s418 = scalar_select %p417, %s26, 1
        %s419 = smul.addr %s418, 8
        %s420 = scalar_lea.vmem %s0, %s419
      $region20: #{_lambda_.4} parent=15 // pred_fallthru
        _
      // Predicated region
      $region21: #{_lambda_.4} parent=15 // pred_check
        %p421 = pneg %p77
      $region22: #{_lambda_.4} parent=15 // pred_check_branch
        %423 = sbr.rel (%p421) target = $region24
      $region23: #{_lambda_.4} parent=15 // pred_region
        %p424 = scmp.lt.s32.totalorder %s27, 1
        %s425 = scalar_select %p424, %s27, 1
        %s426 = scalar_lea.vmem %s1, %s425
      $region24: #{_lambda_.4} parent=15 // pred_fallthru
        _
      // Predicated region
      $region25: #{_lambda_.4} parent=15 // pred_check
        %p427 = pneg %p103
      $region26: #{_lambda_.4} parent=15 // pred_check_branch
        %429 = sbr.rel (%p427) target = $region28
      $region27: #{_lambda_.4} parent=15 // pred_region
        %p430 = scmp.lt.s32.totalorder %s27, 1
        %s431 = scalar_select %p430, %s27, 1
        %s432 = scalar_lea.vmem %s2, %s431
      $region28: #{_lambda_.4} parent=15 // pred_fallthru
        _
      // Predicated region
      $region29: #{_lambda_.4} parent=15 // pred_check
        %p433 = pneg %p129
      $region30: #{_lambda_.4} parent=15 // pred_check_branch
        %435 = sbr.rel (%p433) target = $region32
      $region31: #{_lambda_.4} parent=15 // pred_region
        %p436 = scmp.lt.s32.totalorder %s27, 1
        %s437 = scalar_select %p436, %s27, 1
        %s438 = smul.addr %s437, 4
        %s439 = smul.addr %s438, 4
        %s440 = scalar_lea.vmem %s3, %s439
      $region32: #{_lambda_.4} parent=15 // pred_fallthru
        _
      // Predicated region
      $region33: #{_lambda_.4} parent=15 // pred_check
        %p441 = pneg %p155
      $region34: #{_lambda_.4} parent=15 // pred_check_branch
        %443 = sbr.rel (%p441) target = $region36
      $region35: #{_lambda_.4} parent=15 // pred_region
        %p444 = scmp.lt.s32.totalorder %s27, 1
        %s445 = scalar_select %p444, %s27, 1
        %s446 = scalar_lea.vmem %s4, %s445
      $region36: #{_lambda_.4} parent=15 // pred_fallthru
        _
      // Predicated region
      $region37: #{_lambda_.4} parent=15 // pred_check
        %p447 = pneg %p181
      $region38: #{_lambda_.4} parent=15 // pred_check_branch
        %449 = sbr.rel (%p447) target = $region40
      $region39: #{_lambda_.4} parent=15 // pred_region
        %p450 = scmp.lt.s32.totalorder %s27, 1
        %s451 = scalar_select %p450, %s27, 1
        %s452 = smul.addr %s451, 4
        %s453 = smul.addr %s452, 4
        %s454 = scalar_lea.vmem %s5, %s453
      $region40: #{_lambda_.4} parent=15 // pred_fallthru
        _
      // Predicated region
      $region41: #{_lambda_.4} parent=15 // pred_check
        %p455 = pneg %p207
      $region42: #{_lambda_.4} parent=15 // pred_check_branch
        %457 = sbr.rel (%p455) target = $region44
      $region43: #{_lambda_.4} parent=15 // pred_region
        %p458 = scmp.lt.s32.totalorder %s27, 1
        %s459 = scalar_select %p458, %s27, 1
        %s460 = scalar_lea.vmem %s6, %s459
      $region44: #{_lambda_.4} parent=15 // pred_fallthru
        _
      // Predicated region
      $region45: #{_lambda_.4} parent=15 // pred_check
        %p461 = pneg %p233
      $region46: #{_lambda_.4} parent=15 // pred_check_branch
        %463 = sbr.rel (%p461) target = $region48
      $region47: #{_lambda_.4} parent=15 // pred_region
        %p464 = scmp.lt.s32.totalorder %s27, 1
        %s465 = scalar_select %p464, %s27, 1
        %s466 = scalar_lea.vmem %s7, %s465
      $region48: #{_lambda_.4} parent=15 // pred_fallthru
        _
      // Predicated region
      $region49: #{_lambda_.4} parent=15 // pred_check
        %p467 = pneg %p259
      $region50: #{_lambda_.4} parent=15 // pred_check_branch
        %469 = sbr.rel (%p467) target = $region52
      $region51: #{_lambda_.4} parent=15 // pred_region
        %p470 = scmp.lt.s32.totalorder %s27, 1
        %s471 = scalar_select %p470, %s27, 1
        %s472 = scalar_lea.vmem %s8, %s471
      $region52: #{_lambda_.4} parent=15 // pred_fallthru
        _
      // Predicated region
      $region53: #{_lambda_.4} parent=15 // pred_check
        %p473 = pneg %p285
      $region54: #{_lambda_.4} parent=15 // pred_check_branch
        %475 = sbr.rel (%p473) target = $region56
      $region55: #{_lambda_.4} parent=15 // pred_region
        %p476 = scmp.lt.s32.totalorder %s27, 1
        %s477 = scalar_select %p476, %s27, 1
        %s478 = smul.addr %s477, 4
        %s479 = smul.addr %s478, 4
        %s480 = scalar_lea.vmem %s9, %s479
      $region56: #{_lambda_.4} parent=15 // pred_fallthru
        _
      // Predicated region
      $region57: #{_lambda_.4} parent=15 // pred_check
        %p481 = pneg %p311
      $region58: #{_lambda_.4} parent=15 // pred_check_branch
        %483 = sbr.rel (%p481) target = $region60
      $region59: #{_lambda_.4} parent=15 // pred_region
        %p484 = scmp.lt.s32.totalorder %s27, 1
        %s485 = scalar_select %p484, %s27, 1
        %s486 = scalar_lea.vmem %s10, %s485
      $region60: #{_lambda_.4} parent=15 // pred_fallthru
        _
      // Predicated region
      $region61: #{_lambda_.4} parent=15 // pred_check
        %p487 = pneg %p337
      $region62: #{_lambda_.4} parent=15 // pred_check_branch
        %489 = sbr.rel (%p487) target = $region64
      $region63: #{_lambda_.4} parent=15 // pred_region
        %p490 = scmp.lt.s32.totalorder %s27, 1
        %s491 = scalar_select %p490, %s27, 1
        %s492 = smul.addr %s491, 16
        %s493 = smul.addr %s492, 4
        %s494 = scalar_lea.vmem %s11, %s493
      $region64: #{_lambda_.4} parent=15 // pred_fallthru
        _
      // Predicated region
      $region65: #{_lambda_.4} parent=15 // pred_check
        %p495 = pneg %p363
      $region66: #{_lambda_.4} parent=15 // pred_check_branch
        %497 = sbr.rel (%p495) target = $region68
      $region67: #{_lambda_.4} parent=15 // pred_region
        %p498 = scmp.lt.s32.totalorder %s27, 1
        %s499 = scalar_select %p498, %s27, 1
        %s500 = scalar_lea.vmem %s12, %s499
      $region68: #{_lambda_.4} parent=15 // pred_fallthru
        _
    $region16: #{_lambda_.4} parent=5 // pred_fallthru
      _
    %p501 = scmp.le.s32.totalorder 1, %s19
    %p502 = scmp.lt.s32.totalorder %s19, 5
    %p503 = pnand %p501, %p502
    %p504 = pneg %p503
    // Predicated region
    $region69: #{_lambda_.4} parent=5 // pred_check
      _
    $region70: #{_lambda_.4} parent=5 // pred_check_branch
      %506 = sbr.rel (%p503) target = $region72
    $region71: #{_lambda_.4} parent=5 // pred_region
      %s507 = ssub.s32 %s19, 1
      %p508 = scmp.lt.s32.totalorder %s28, 1
      %s509 = scalar_select %p508, %s28, 1
      %s510 = smul.addr %s509, 8
      %s511 = scalar_lea.vmem %s0, %s510
      %p512 = pneg %p57
      %p513 = pneg %p54
      %p514 = scmp.lt.s32.totalorder %s29, 1
      %s515 = scalar_select %p514, %s29, 1
      %s516 = scalar_lea.vmem %s1, %s515
      %p517 = pneg %p83
      %p518 = pneg %p80
      %p519 = scmp.lt.s32.totalorder %s29, 1
      %s520 = scalar_select %p519, %s29, 1
      %s521 = scalar_lea.vmem %s2, %s520
      %p522 = pneg %p109
      %p523 = pneg %p106
      %p524 = scmp.lt.s32.totalorder %s29, 1
      %s525 = scalar_select %p524, %s29, 1
      %s526 = smul.addr %s525, 4
      %s527 = smul.addr %s526, 4
      %s528 = scalar_lea.vmem %s3, %s527
      %p529 = pneg %p135
      %p530 = pneg %p132
      %p531 = scmp.lt.s32.totalorder %s29, 1
      %s532 = scalar_select %p531, %s29, 1
      %s533 = scalar_lea.vmem %s4, %s532
      %p534 = pneg %p161
      %p535 = pneg %p158
      %p536 = scmp.lt.s32.totalorder %s29, 1
      %s537 = scalar_select %p536, %s29, 1
      %s538 = smul.addr %s537, 4
      %s539 = smul.addr %s538, 4
      %s540 = scalar_lea.vmem %s5, %s539
      %p541 = pneg %p187
      %p542 = pneg %p184
      %p543 = scmp.lt.s32.totalorder %s29, 1
      %s544 = scalar_select %p543, %s29, 1
      %s545 = scalar_lea.vmem %s6, %s544
      %p546 = pneg %p213
      %p547 = pneg %p210
      %p548 = scmp.lt.s32.totalorder %s29, 1
      %s549 = scalar_select %p548, %s29, 1
      %s550 = scalar_lea.vmem %s7, %s549
      %p551 = pneg %p239
      %p552 = pneg %p236
      %p553 = scmp.lt.s32.totalorder %s29, 1
      %s554 = scalar_select %p553, %s29, 1
      %s555 = scalar_lea.vmem %s8, %s554
      %p556 = pneg %p265
      %p557 = pneg %p262
      %p558 = scmp.lt.s32.totalorder %s29, 1
      %s559 = scalar_select %p558, %s29, 1
      %s560 = smul.addr %s559, 4
      %s561 = smul.addr %s560, 4
      %s562 = scalar_lea.vmem %s9, %s561
      %p563 = pneg %p291
      %p564 = pneg %p288
      %p565 = scmp.lt.s32.totalorder %s29, 1
      %s566 = scalar_select %p565, %s29, 1
      %s567 = scalar_lea.vmem %s10, %s566
      %p568 = pneg %p317
      %p569 = pneg %p314
      %p570 = scmp.lt.s32.totalorder %s29, 1
      %s571 = scalar_select %p570, %s29, 1
      %s572 = smul.addr %s571, 16
      %s573 = smul.addr %s572, 4
      %s574 = scalar_lea.vmem %s11, %s573
      %p575 = pneg %p343
      %p576 = pneg %p340
      %p577 = scmp.lt.s32.totalorder %s29, 1
      %s578 = scalar_select %p577, %s29, 1
      %s579 = scalar_lea.vmem %s12, %s578
      %p580 = pneg %p369
      %p581 = pneg %p366
      %p582 = pneg %p395
      %p583 = pneg %p392
      %p584 = scmp.lt.s32.totalorder %s28, 1
      %s585 = scalar_select %p584, %s28, 1
      %s586 = smul.addr %s585, 8
      %s587 = scalar_lea.vmem %s13, %s586
      %p588 = scmp.lt.s32.totalorder %s28, 1
      %s589 = scalar_select %p588, %s28, 1
      %s590 = smul.addr %s589, 8
      %s591 = scalar_lea.vmem %s0, %s590
      %p592 = scmp.lt.s32.totalorder %s29, 1
      %s593 = scalar_select %p592, %s29, 1
      %s594 = scalar_lea.vmem %s1, %s593
      %p595 = scmp.lt.s32.totalorder %s29, 1
      %s596 = scalar_select %p595, %s29, 1
      %s597 = scalar_lea.vmem %s2, %s596
      %p598 = scmp.lt.s32.totalorder %s29, 1
      %s599 = scalar_select %p598, %s29, 1
      %s600 = smul.addr %s599, 4
      %s601 = smul.addr %s600, 4
      %s602 = scalar_lea.vmem %s3, %s601
      %p603 = scmp.lt.s32.totalorder %s29, 1
      %s604 = scalar_select %p603, %s29, 1
      %s605 = scalar_lea.vmem %s4, %s604
      %p606 = scmp.lt.s32.totalorder %s29, 1
      %s607 = scalar_select %p606, %s29, 1
      %s608 = smul.addr %s607, 4
      %s609 = smul.addr %s608, 4
      %s610 = scalar_lea.vmem %s5, %s609
      %p611 = scmp.lt.s32.totalorder %s29, 1
      %s612 = scalar_select %p611, %s29, 1
      %s613 = scalar_lea.vmem %s6, %s612
      %p614 = scmp.lt.s32.totalorder %s29, 1
      %s615 = scalar_select %p614, %s29, 1
      %s616 = scalar_lea.vmem %s7, %s615
      %p617 = scmp.lt.s32.totalorder %s29, 1
      %s618 = scalar_select %p617, %s29, 1
      %s619 = scalar_lea.vmem %s8, %s618
      %p620 = scmp.lt.s32.totalorder %s29, 1
      %s621 = scalar_select %p620, %s29, 1
      %s622 = smul.addr %s621, 4
      %s623 = smul.addr %s622, 4
      %s624 = scalar_lea.vmem %s9, %s623
      %p625 = scmp.lt.s32.totalorder %s29, 1
      %s626 = scalar_select %p625, %s29, 1
      %s627 = scalar_lea.vmem %s10, %s626
      %p628 = scmp.lt.s32.totalorder %s29, 1
      %s629 = scalar_select %p628, %s29, 1
      %s630 = smul.addr %s629, 16
      %s631 = smul.addr %s630, 4
      %s632 = scalar_lea.vmem %s11, %s631
      %p633 = scmp.lt.s32.totalorder %s29, 1
      %s634 = scalar_select %p633, %s29, 1
      %s635 = scalar_lea.vmem %s12, %s634
      %p636 = scmp.lt.s32.totalorder %s28, 1
      %s637 = scalar_select %p636, %s28, 1
      %s638 = smul.addr %s637, 8
      %s639 = scalar_lea.vmem %s13, %s638
      %p641 = scmp.eq.s32.totalorder %s29, 0
      // Predicated region
      $region73: #{_lambda_.4} parent=71 // pred_check
        %p642 = pneg %p641
      $region74: #{_lambda_.4} parent=71 // pred_check_branch
        %644 = sbr.rel (%p642) target = $region76
      $region75: #{_lambda_.4} parent=71 // pred_region
        %v645 = vld [vmem:[%s591] sm:$0x1f]
        %vm646 = vcmask 258048
        %647 = vst.msk [vmem:[#allocation2] sm:$0x1f] %vm646, %v645
      $region76: #{_lambda_.4} parent=71 // pred_fallthru
        _
      %v648 = vld [vmem:[#allocation2] sm:$0x1f]
      %v649 = vld [vmem:[%s594] sm:$0x1]
      %v650 = vld [vmem:[%s597] sm:$0x1]
      %vm651 = vcmask 258048
      %v652 = vsel %vm651, %v648, 0.0
      %653 = vadd.xlane.f32.xlu0 %v652
      %v654 = vpop.xlane.xlu0 %653
      %v655 = vrcp.pop 32.0
      %v656 = vmul.f32 32.0, %v655
      %v657 = vsub.f32 1.0, %v656
      %v658 = vmul.f32 %v655, %v657
      %v659 = vadd.f32 %v655, %v658
      %vm660 = vweird.f32 %v655
      %v661 = vsel %vm660, %v655, %v659
      %v662 = vmul.f32 %v654, %v661
      %v663 = vsub.f32 %v648, %v662
      %v664 = vmul.f32 %v663, %v663
      %v665 = vsel %vm651, %v664, 0.0
      %666 = vadd.xlane.f32.xlu0 %v665
      %v667 = vpop.xlane.xlu0 %666
      %v668 = vmul.f32 %v667, %v661
      %v669 = vadd.f32 %v668, 1e-05
      %v670 = vrsqrt.pop %v669
      %v671 = vmul.f32 %v670, %v669
      %v672 = vmul.f32 %v671, %v670
      %v673 = vmul.f32 0.5, %v672
      %v674 = vsub.f32 1.5, %v673
      %v675 = vmul.f32 %v670, %v674
      %vm676 = vweird.f32 %v669
      %vm677 = vweird.f32 %v670
      %vm678 = vmor %vm676, %vm677
      %v679 = vsel %vm678, %v670, %v675
      %v680 = vmul.f32 %v663, %v679
      %v682 = vperm.slane %v649, 0
      %v684 = vmul.f32 %v680, %v682
      %v686 = vperm.slane %v650, 0
      %v688 = vadd.f32 %v684, %v686
      %v689 = vld [vmem:[%s602] sm:$0xf]
      %v690 = vld [vmem:[%s602 + $0x4] sm:$0xf]
      %v691 = vld [vmem:[%s602 + $0x8] sm:$0xf]
      %v692 = vld [vmem:[%s602 + $0xc] sm:$0xf]
      %v693 = vpack.c.bf16 %v688, %v688
      %v694 = vld [vmem:[%s605] sm:$0x1]
      %v696 = vperm.slane %v694, 0
      %v702 = vunpack.c.l.b16 %v689
      %v703 = vunpack.c.l.b16 %v690
      %v704 = vunpack.c.l.b16 %v691
      %v705 = vunpack.c.l.b16 %v692
      %v706 = vpack.c.b16 %v703, %v702
      %v707 = vpack.c.b16 %v705, %v704
      %vm710 = vcmask 261120
      %v712 = vsel %vm710, %v693, 0
      %714 = vmatpush.bf16.msra.mxu0 0
      %715 = vmatpush.bf16.msra.mxu0 0
      %716 = vmatpush.bf16.msra.mxu0 0
      %717 = vmatpush.bf16.msra.mxu0 0
      %718 = vmatpush.bf16.msra.mxu0 0
      %719 = vmatpush.bf16.msra.mxu0 0
      %720 = vmatpush.bf16.msra.mxu0 %v707
      %721 = vmatpush.bf16.msra.mxu0 %v706
      %722 = vmatmul.bf16.gmra.mxu0 %v712
      %v723 = vpop.f32.mrf.mxu0
      %v724 = vadd.f32 %v696, %v723
      %v725 = vpop.f32.mrf.mxu0
      %726 = vdwg.mxu0
      %v727 = vmul.f32 %v724, 0.35355338
      %729 = vrot.lane.b32.xlu0 %v727, 120
      %v730 = vpop.permute.xlu0 %729
      %732 = vrot.lane.b32.xlu0 %v727, 112
      %v733 = vpop.permute.xlu0 %732
      %735 = vrot.lane.b32.xlu0 %v727, 104
      %v736 = vpop.permute.xlu0 %735
      %v738 = vpack.c.bf16 %v727, %v727
      %v739 = vpack.c.bf16 %v730, %v730
      %v740 = vpack.c.bf16 %v733, %v733
      %v741 = vpack.c.bf16 %v736, %v736
      %743 = vrot.lane.b32.xlu0 %v724, 120
      %v744 = vpop.permute.xlu0 %743
      %746 = vrot.lane.b32.xlu0 %v724, 112
      %v747 = vpop.permute.xlu0 %746
      %749 = vrot.lane.b32.xlu0 %v724, 104
      %v750 = vpop.permute.xlu0 %749
      %v752 = vpack.c.bf16 %v724, %v724
      %v753 = vpack.c.bf16 %v744, %v744
      %v754 = vpack.c.bf16 %v747, %v747
      %v755 = vpack.c.bf16 %v750, %v750
      %v757 = vunpack.c.l.b16 %v752
      %v758 = vpack.c.b16 %v757, %v757
      %759 = vrot.lane.b32.xlu0 %v758, 96
      %v760 = vpop.permute.xlu0 %759
      %vm761 = vcmask 64512
      %v763 = vsel %vm761, %v738, 0
      %v766 = vsel %vm761, %v760, 0
      %768 = vmatpush.bf16.xpose.msra.mxu0 0
      %769 = vmatpush.bf16.xpose.msra.mxu0 0
      %770 = vmatpush.bf16.xpose.msra.mxu0 0
      %771 = vmatpush.bf16.xpose.msra.mxu0 0
      %772 = vmatpush.bf16.xpose.msra.mxu0 0
      %773 = vmatpush.bf16.xpose.msra.mxu0 0
      %774 = vmatpush.bf16.xpose.msra.mxu0 0
      %775 = vmatpush.bf16.xpose.msra.mxu0 %v766
      %776 = vmatmul.bf16.gmra.mxu0 %v763
      %v777 = vpop.f32.mrf.mxu0
      %v778 = vadd.f32 0.0, %v777
      %v779 = vpop.f32.mrf.mxu0
      %780 = vdwg.mxu0
      %v782 = vunpack.c.l.b16 %v753
      %v783 = vpack.c.b16 %v782, %v782
      %784 = vrot.lane.b32.xlu0 %v783, 96
      %v785 = vpop.permute.xlu0 %784
      %v787 = vsel %vm761, %v739, 0
      %v790 = vsel %vm761, %v785, 0
      %792 = vmatpush.bf16.xpose.msra.mxu0 0
      %793 = vmatpush.bf16.xpose.msra.mxu0 0
      %794 = vmatpush.bf16.xpose.msra.mxu0 0
      %795 = vmatpush.bf16.xpose.msra.mxu0 0
      %796 = vmatpush.bf16.xpose.msra.mxu0 0
      %797 = vmatpush.bf16.xpose.msra.mxu0 0
      %798 = vmatpush.bf16.xpose.msra.mxu0 0
      %799 = vmatpush.bf16.xpose.msra.mxu0 %v790
      %800 = vmatmul.bf16.gmra.mxu0 %v787
      %v801 = vpop.f32.mrf.mxu0
      %v802 = vadd.f32 0.0, %v801
      %v803 = vpop.f32.mrf.mxu0
      %804 = vdwg.mxu0
      %v806 = vunpack.c.l.b16 %v754
      %v807 = vpack.c.b16 %v806, %v806
      %808 = vrot.lane.b32.xlu0 %v807, 96
      %v809 = vpop.permute.xlu0 %808
      %v811 = vsel %vm761, %v740, 0
      %v814 = vsel %vm761, %v809, 0
      %816 = vmatpush.bf16.xpose.msra.mxu0 0
      %817 = vmatpush.bf16.xpose.msra.mxu0 0
      %818 = vmatpush.bf16.xpose.msra.mxu0 0
      %819 = vmatpush.bf16.xpose.msra.mxu0 0
      %820 = vmatpush.bf16.xpose.msra.mxu0 0
      %821 = vmatpush.bf16.xpose.msra.mxu0 0
      %822 = vmatpush.bf16.xpose.msra.mxu0 0
      %823 = vmatpush.bf16.xpose.msra.mxu0 %v814
      %824 = vmatmul.bf16.gmra.mxu0 %v811
      %v825 = vpop.f32.mrf.mxu0
      %v826 = vadd.f32 0.0, %v825
      %v827 = vpop.f32.mrf.mxu0
      %828 = vdwg.mxu0
      %v830 = vunpack.c.l.b16 %v755
      %v831 = vpack.c.b16 %v830, %v830
      %832 = vrot.lane.b32.xlu0 %v831, 96
      %v833 = vpop.permute.xlu0 %832
      %v835 = vsel %vm761, %v741, 0
      %v838 = vsel %vm761, %v833, 0
      %840 = vmatpush.bf16.xpose.msra.mxu0 0
      %841 = vmatpush.bf16.xpose.msra.mxu0 0
      %842 = vmatpush.bf16.xpose.msra.mxu0 0
      %843 = vmatpush.bf16.xpose.msra.mxu0 0
      %844 = vmatpush.bf16.xpose.msra.mxu0 0
      %845 = vmatpush.bf16.xpose.msra.mxu0 0
      %846 = vmatpush.bf16.xpose.msra.mxu0 0
      %847 = vmatpush.bf16.xpose.msra.mxu0 %v838
      %848 = vmatmul.bf16.gmra.mxu0 %v835
      %v849 = vpop.f32.mrf.mxu0
      %v850 = vadd.f32 0.0, %v849
      %v851 = vpop.f32.mrf.mxu0
      %852 = vdwg.mxu0
      %vm853 = vcmask 36864
      %v854 = vsel %vm853, %v778, -inf
      %855 = vmax.xlane.f32.xlu0 %v854
      %v856 = vpop.xlane.xlu0 %855
      %v857 = vsel %vm853, %v802, -inf
      %858 = vmax.xlane.f32.xlu0 %v857
      %v859 = vpop.xlane.xlu0 %858
      %v860 = vsel %vm853, %v826, -inf
      %861 = vmax.xlane.f32.xlu0 %v860
      %v862 = vpop.xlane.xlu0 %861
      %v863 = vsel %vm853, %v850, -inf
      %864 = vmax.xlane.f32.xlu0 %v863
      %v865 = vpop.xlane.xlu0 %864
      %v866 = vsub.f32 %v778, %v856
      %v867 = vsub.f32 %v802, %v859
      %v868 = vsub.f32 %v826, %v862
      %v869 = vsub.f32 %v850, %v865
      %v870 = vmul.f32 %v866, 1.442695
      %v871 = vpow.pop %v870
      %v872 = vmul.f32 %v867, 1.442695
      %v873 = vpow.pop %v872
      %v874 = vmul.f32 %v868, 1.442695
      %v875 = vpow.pop %v874
      %v876 = vmul.f32 %v869, 1.442695
      %v877 = vpow.pop %v876
      %v878 = vsel %vm853, %v871, 0.0
      %879 = vadd.xlane.f32.xlu0 %v878
      %v880 = vpop.xlane.xlu0 %879
      %v881 = vsel %vm853, %v873, 0.0
      %882 = vadd.xlane.f32.xlu0 %v881
      %v883 = vpop.xlane.xlu0 %882
      %v884 = vsel %vm853, %v875, 0.0
      %885 = vadd.xlane.f32.xlu0 %v884
      %v886 = vpop.xlane.xlu0 %885
      %v887 = vsel %vm853, %v877, 0.0
      %888 = vadd.xlane.f32.xlu0 %v887
      %v889 = vpop.xlane.xlu0 %888
      %v890 = vrcp.pop %v880
      %v891 = vrcp.pop %v883
      %v892 = vrcp.pop %v886
      %v893 = vrcp.pop %v889
      %v894 = vmul.f32 %v871, %v890
      %v895 = vmul.f32 %v873, %v891
      %v896 = vmul.f32 %v875, %v892
      %v897 = vmul.f32 %v877, %v893
      %v898 = vpack.c.bf16 %v894, %v894
      %v899 = vpack.c.bf16 %v895, %v895
      %v900 = vpack.c.bf16 %v896, %v896
      %v901 = vpack.c.bf16 %v897, %v897
      %902 = vrot.lane.b32.xlu0 %v758, 64
      %v903 = vpop.permute.xlu0 %902
      %vm904 = vcmask 39936
      %v906 = vsel %vm904, %v898, 0
      %vm908 = vcmask 1041408
      %vm909 = vcmask 1042432
      %v910 = vsel %vm908, 4294967295, 65535
      %v911 = vsel %vm909, %v910, 0
      %v913 = vand.u32 %v903, %v911
      %915 = vmatpush.bf16.msra.mxu0 0
      %916 = vmatpush.bf16.msra.mxu0 0
      %917 = vmatpush.bf16.msra.mxu0 0
      %918 = vmatpush.bf16.msra.mxu0 0
      %919 = vmatpush.bf16.msra.mxu0 0
      %920 = vmatpush.bf16.msra.mxu0 0
      %921 = vmatpush.bf16.msra.mxu0 0
      %922 = vmatpush.bf16.msra.mxu0 %v913
      %923 = vmatmul.bf16.gmra.mxu0 %v906
      %v924 = vpop.f32.mrf.mxu0
      %v925 = vadd.f32 0.0, %v924
      %v926 = vpop.f32.mrf.mxu0
      %927 = vdwg.mxu0
      %928 = vrot.lane.b32.xlu0 %v783, 64
      %v929 = vpop.permute.xlu0 %928
      %v931 = vsel %vm904, %v899, 0
      %v934 = vand.u32 %v929, %v911
      %936 = vmatpush.bf16.msra.mxu0 0
      %937 = vmatpush.bf16.msra.mxu0 0
      %938 = vmatpush.bf16.msra.mxu0 0
      %939 = vmatpush.bf16.msra.mxu0 0
      %940 = vmatpush.bf16.msra.mxu0 0
      %941 = vmatpush.bf16.msra.mxu0 0
      %942 = vmatpush.bf16.msra.mxu0 0
      %943 = vmatpush.bf16.msra.mxu0 %v934
      %944 = vmatmul.bf16.gmra.mxu0 %v931
      %v945 = vpop.f32.mrf.mxu0
      %v946 = vadd.f32 0.0, %v945
      %v947 = vpop.f32.mrf.mxu0
      %948 = vdwg.mxu0
      %949 = vrot.lane.b32.xlu0 %v807, 64
      %v950 = vpop.permute.xlu0 %949
      %v952 = vsel %vm904, %v900, 0
      %v955 = vand.u32 %v950, %v911
      %957 = vmatpush.bf16.msra.mxu0 0
      %958 = vmatpush.bf16.msra.mxu0 0
      %959 = vmatpush.bf16.msra.mxu0 0
      %960 = vmatpush.bf16.msra.mxu0 0
      %961 = vmatpush.bf16.msra.mxu0 0
      %962 = vmatpush.bf16.msra.mxu0 0
      %963 = vmatpush.bf16.msra.mxu0 0
      %964 = vmatpush.bf16.msra.mxu0 %v955
      %965 = vmatmul.bf16.gmra.mxu0 %v952
      %v966 = vpop.f32.mrf.mxu0
      %v967 = vadd.f32 0.0, %v966
      %v968 = vpop.f32.mrf.mxu0
      %969 = vdwg.mxu0
      %970 = vrot.lane.b32.xlu0 %v831, 64
      %v971 = vpop.permute.xlu0 %970
      %v973 = vsel %vm904, %v901, 0
      %v976 = vand.u32 %v971, %v911
      %978 = vmatpush.bf16.msra.mxu0 0
      %979 = vmatpush.bf16.msra.mxu0 0
      %980 = vmatpush.bf16.msra.mxu0 0
      %981 = vmatpush.bf16.msra.mxu0 0
      %982 = vmatpush.bf16.msra.mxu0 0
      %983 = vmatpush.bf16.msra.mxu0 0
      %984 = vmatpush.bf16.msra.mxu0 0
      %985 = vmatpush.bf16.msra.mxu0 %v976
      %986 = vmatmul.bf16.gmra.mxu0 %v973
      %v987 = vpop.f32.mrf.mxu0
      %v988 = vadd.f32 0.0, %v987
      %v989 = vpop.f32.mrf.mxu0
      %990 = vdwg.mxu0
      %v991 = vpack.c.bf16 %v925, %v925
      %vm992 = vcmask 59392
      %vm993 = vsmask.f32 2304
      %vm994 = vmand %vm992, %vm993
      %v995 = vld [vmem:[#allocation3] sm:$0x7]
      %v996 = vsel %vm994, %v991, %v995
      %997 = vst [vmem:[#allocation3] sm:$0x7] %v996
      %v998 = vpack.c.bf16 %v946, %v946
      %1000 = vrot.lane.b32.xlu0 %v998, 8
      %v1001 = vpop.permute.xlu0 %1000
      %vm1003 = vcmask 124992
      %vm1004 = vmand %vm1003, %vm993
      %v1005 = vld [vmem:[#allocation3] sm:$0x7]
      %v1006 = vsel %vm1004, %v1001, %v1005
      %1007 = vst [vmem:[#allocation3] sm:$0x7] %v1006
      %v1008 = vpack.c.bf16 %v967, %v967
      %1010 = vrot.lane.b32.xlu0 %v1008, 16
      %v1011 = vpop.permute.xlu0 %1010
      %vm1013 = vcmask 190592
      %vm1014 = vmand %vm1013, %vm993
      %v1015 = vld [vmem:[#allocation3] sm:$0x7]
      %v1016 = vsel %vm1014, %v1011, %v1015
      %1017 = vst [vmem:[#allocation3] sm:$0x7] %v1016
      %v1018 = vpack.c.bf16 %v988, %v988
      %1020 = vrot.lane.b32.xlu0 %v1018, 24
      %v1021 = vpop.permute.xlu0 %1020
      %vm1023 = vcmask 256192
      %vm1024 = vmand %vm1023, %vm993
      %v1025 = vld [vmem:[#allocation3] sm:$0x7]
      %v1026 = vsel %vm1024, %v1021, %v1025
      %1027 = vst [vmem:[#allocation3] sm:$0x7] %v1026
      %v1028 = vld [vmem:[#allocation3] sm:$0x7]
      %v1029 = vld [vmem:[%s610] sm:$0xf]
      %v1030 = vld [vmem:[%s610 + $0x4] sm:$0xf]
      %v1031 = vld [vmem:[%s610 + $0x8] sm:$0xf]
      %v1032 = vld [vmem:[%s610 + $0xc] sm:$0xf]
      %v1033 = vld [vmem:[%s613] sm:$0x1]
      %v1035 = vperm.slane %v1033, 0
      %v1041 = vunpack.c.l.b16 %v1029
      %v1042 = vunpack.c.l.b16 %v1030
      %v1043 = vunpack.c.l.b16 %v1031
      %v1044 = vunpack.c.l.b16 %v1032
      %v1045 = vpack.c.b16 %v1042, %v1041
      %v1046 = vpack.c.b16 %v1044, %v1043
      %v1050 = vsel %vm710, %v1028, 0
      %1052 = vmatpush.bf16.msra.mxu0 0
      %1053 = vmatpush.bf16.msra.mxu0 0
      %1054 = vmatpush.bf16.msra.mxu0 0
      %1055 = vmatpush.bf16.msra.mxu0 0
      %1056 = vmatpush.bf16.msra.mxu0 0
      %1057 = vmatpush.bf16.msra.mxu0 0
      %1058 = vmatpush.bf16.msra.mxu0 %v1046
      %1059 = vmatpush.bf16.msra.mxu0 %v1045
      %1060 = vmatmul.bf16.gmra.mxu0 %v1050
      %v1061 = vpop.f32.mrf.mxu0
      %v1062 = vadd.f32 %v1035, %v1061
      %v1063 = vpop.f32.mrf.mxu0
      %1064 = vdwg.mxu0
      %v1065 = vadd.f32 %v648, %v1062
      %v1066 = vld [vmem:[%s616] sm:$0x1]
      %v1067 = vld [vmem:[%s619] sm:$0x1]
      %v1068 = vsel %vm651, %v1065, 0.0
      %1069 = vadd.xlane.f32.xlu0 %v1068
      %v1070 = vpop.xlane.xlu0 %1069
      %v1071 = vmul.f32 %v1070, %v661
      %v1072 = vsub.f32 %v1065, %v1071
      %v1073 = vmul.f32 %v1072, %v1072
      %v1074 = vsel %vm651, %v1073, 0.0
      %1075 = vadd.xlane.f32.xlu0 %v1074
      %v1076 = vpop.xlane.xlu0 %1075
      %v1077 = vmul.f32 %v1076, %v661
      %v1078 = vadd.f32 %v1077, 1e-05
      %v1079 = vrsqrt.pop %v1078
      %v1080 = vmul.f32 %v1079, %v1078
      %v1081 = vmul.f32 %v1080, %v1079
      %v1082 = vmul.f32 0.5, %v1081
      %v1083 = vsub.f32 1.5, %v1082
      %v1084 = vmul.f32 %v1079, %v1083
      %vm1085 = vweird.f32 %v1078
      %vm1086 = vweird.f32 %v1079
      %vm1087 = vmor %vm1085, %vm1086
      %v1088 = vsel %vm1087, %v1079, %v1084
      %v1089 = vmul.f32 %v1072, %v1088
      %v1091 = vperm.slane %v1066, 0
      %v1093 = vmul.f32 %v1089, %v1091
      %v1095 = vperm.slane %v1067, 0
      %v1097 = vadd.f32 %v1093, %v1095
      %v1098 = vld [vmem:[%s624] sm:$0xf]
      %v1099 = vld [vmem:[%s624 + $0x4] sm:$0xf]
      %v1100 = vld [vmem:[%s624 + $0x8] sm:$0xf]
      %v1101 = vld [vmem:[%s624 + $0xc] sm:$0xf]
      %v1102 = vpack.c.bf16 %v1097, %v1097
      %v1103 = vld [vmem:[%s627] sm:$0x1]
      %v1105 = vperm.slane %v1103, 0
      %v1111 = vunpack.c.l.b16 %v1098
      %v1112 = vunpack.c.l.b16 %v1099
      %v1113 = vunpack.c.l.b16 %v1100
      %v1114 = vunpack.c.l.b16 %v1101
      %v1115 = vpack.c.b16 %v1112, %v1111
      %v1116 = vpack.c.b16 %v1114, %v1113
      %v1120 = vsel %vm710, %v1102, 0
      %1122 = vmatpush.bf16.msra.mxu0 0
      %1123 = vmatpush.bf16.msra.mxu0 0
      %1124 = vmatpush.bf16.msra.mxu0 0
      %1125 = vmatpush.bf16.msra.mxu0 0
      %1126 = vmatpush.bf16.msra.mxu0 0
      %1127 = vmatpush.bf16.msra.mxu0 0
      %1128 = vmatpush.bf16.msra.mxu0 %v1116
      %1129 = vmatpush.bf16.msra.mxu0 %v1115
      %1130 = vmatmul.bf16.gmra.mxu0 %v1120
      %v1131 = vpop.f32.mrf.mxu0
      %v1132 = vadd.f32 %v1105, %v1131
      %v1133 = vpop.f32.mrf.mxu0
      %1134 = vdwg.mxu0
      %v1135 = vmul.f32 %v1132, 0.5
      %v1136 = vmul.f32 %v1132, 0.044715
      %v1137 = vmul.f32 %v1136, %v1132
      %v1138 = vmul.f32 %v1137, %v1132
      %v1139 = vadd.f32 %v1132, %v1138
      %v1140 = vmul.f32 %v1139, 0.7978846
      %v1141 = vtanh.pop %v1140
      %v1142 = vadd.f32 %v1141, 1.0
      %v1143 = vmul.f32 %v1135, %v1142
      %v1144 = vld [vmem:[%s632] sm:$0xf]
      %v1145 = vld [vmem:[%s632 + $0x4] sm:$0xf]
      %v1146 = vld [vmem:[%s632 + $0x8] sm:$0xf]
      %v1147 = vld [vmem:[%s632 + $0xc] sm:$0xf]
      %v1148 = vld [vmem:[%s632 + $0x10] sm:$0xf]
      %v1149 = vld [vmem:[%s632 + $0x14] sm:$0xf]
      %v1150 = vld [vmem:[%s632 + $0x18] sm:$0xf]
      %v1151 = vld [vmem:[%s632 + $0x1c] sm:$0xf]
      %v1152 = vld [vmem:[%s632 + $0x20] sm:$0xf]
      %v1153 = vld [vmem:[%s632 + $0x24] sm:$0xf]
      %v1154 = vld [vmem:[%s632 + $0x28] sm:$0xf]
      %v1155 = vld [vmem:[%s632 + $0x2c] sm:$0xf]
      %v1156 = vld [vmem:[%s632 + $0x30] sm:$0xf]
      %v1157 = vld [vmem:[%s632 + $0x34] sm:$0xf]
      %v1158 = vld [vmem:[%s632 + $0x38] sm:$0xf]
      %v1159 = vld [vmem:[%s632 + $0x3c] sm:$0xf]
      %v1160 = vpack.c.bf16 %v1143, %v1143
      %v1161 = vld [vmem:[%s635] sm:$0x1]
      %v1163 = vperm.slane %v1161, 0
      %v1181 = vunpack.c.l.b16 %v1144
      %v1182 = vunpack.c.l.b16 %v1145
      %v1183 = vunpack.c.l.b16 %v1146
      %v1184 = vunpack.c.l.b16 %v1147
      %v1185 = vunpack.c.l.b16 %v1148
      %v1186 = vunpack.c.l.b16 %v1149
      %v1187 = vunpack.c.l.b16 %v1150
      %v1188 = vunpack.c.l.b16 %v1151
      %v1189 = vunpack.c.l.b16 %v1152
      %v1190 = vunpack.c.l.b16 %v1153
      %v1191 = vunpack.c.l.b16 %v1154
      %v1192 = vunpack.c.l.b16 %v1155
      %v1193 = vunpack.c.l.b16 %v1156
      %v1194 = vunpack.c.l.b16 %v1157
      %v1195 = vunpack.c.l.b16 %v1158
      %v1196 = vunpack.c.l.b16 %v1159
      %v1197 = vpack.c.b16 %v1182, %v1181
      %v1198 = vpack.c.b16 %v1184, %v1183
      %v1199 = vpack.c.b16 %v1186, %v1185
      %v1200 = vpack.c.b16 %v1188, %v1187
      %v1201 = vpack.c.b16 %v1190, %v1189
      %v1202 = vpack.c.b16 %v1192, %v1191
      %v1203 = vpack.c.b16 %v1194, %v1193
      %v1204 = vpack.c.b16 %v1196, %v1195
      %1213 = vmatpush.bf16.msra.mxu0 %v1204
      %1214 = vmatpush.bf16.msra.mxu0 %v1203
      %1215 = vmatpush.bf16.msra.mxu0 %v1202
      %1216 = vmatpush.bf16.msra.mxu0 %v1201
      %1217 = vmatpush.bf16.msra.mxu0 %v1200
      %1218 = vmatpush.bf16.msra.mxu0 %v1199
      %1219 = vmatpush.bf16.msra.mxu0 %v1198
      %1220 = vmatpush.bf16.msra.mxu0 %v1197
      %1221 = vmatmul.bf16.gmra.mxu0 %v1160
      %v1222 = vpop.f32.mrf.mxu0
      %v1223 = vadd.f32 %v1163, %v1222
      %v1224 = vpop.f32.mrf.mxu0
      %1225 = vdwg.mxu0
      %v1226 = vadd.f32 %v1065, %v1223
      %1227 = vst.msk [vmem:[#allocation2] sm:$0x1f] %vm651, %v1226
      %p1228 = scmp.eq.s32.totalorder %s29, 1
      // Predicated region
      $region77: #{_lambda_.4} parent=71 // pred_check
        %p1229 = pneg %p1228
      $region78: #{_lambda_.4} parent=71 // pred_check_branch
        %1231 = sbr.rel (%p1229) target = $region80
      $region79: #{_lambda_.4} parent=71 // pred_region
        %1232 = vst.msk [vmem:[%s639] sm:$0x1f] %vm651, %v1226
      $region80: #{_lambda_.4} parent=71 // pred_fallthru
        _
      %p1233 = scmp.lt.s32.totalorder %s28, 1
      %s1234 = scalar_select %p1233, %s28, 1
      %s1235 = smul.addr %s1234, 8
      %s1236 = scalar_lea.vmem %s13, %s1235
      // Predicated region
      $region81: #{_lambda_.4} parent=71 // pred_check
        %p1237 = pneg %p392
      $region82: #{_lambda_.4} parent=71 // pred_check_branch
        %1239 = sbr.rel (%p1237) target = $region84
      $region83: #{_lambda_.4} parent=71 // pred_region
        _
      $region84: #{_lambda_.4} parent=71 // pred_fallthru
        _
    $region72: #{_lambda_.4} parent=5 // pred_fallthru
      _
    %p1240 = scmp.le.s32.totalorder 2, %s19
    // Predicated region
    $region85: #{_lambda_.4} parent=5 // pred_check
      %p1241 = pneg %p1240
    $region86: #{_lambda_.4} parent=5 // pred_check_branch
      %1243 = sbr.rel (%p1241) target = $region88
    $region87: #{_lambda_.4} parent=5 // pred_region
      %s1244 = ssub.s32 %s19, 2
      // Predicated region
      $region89: #{_lambda_.4} parent=87 // pred_check
        %p1245 = pneg %p398
      $region90: #{_lambda_.4} parent=87 // pred_check_branch
        %1247 = sbr.rel (%p1245) target = $region92
      $region91: #{_lambda_.4} parent=87 // pred_region
        %p1248 = scmp.lt.s32.totalorder %s30, 1
        %s1249 = scalar_select %p1248, %s30, 1
        %s1250 = smul.addr %s1249, 8
        %s1251 = scalar_lea.vmem %s13, %s1250
      $region92: #{_lambda_.4} parent=87 // pred_fallthru
        _
    $region88: #{_lambda_.4} parent=5 // pred_fallthru
      _
  $region6: #{_lambda_.4} parent=0 // loop_footer
    %s23 = sadd.s32 1, %s19
  $region7: #{_lambda_.4} parent=0 // loop_footer_branch
    %18 = sbr.rel target = $region3
  $region8: #{_lambda_.4} parent=0 // loop_exit
    _

</llo_original>
